<compile_context>
chip_gen: v7x
topology: tpu7x:2x2x1
jax: 0.10.0
libtpu: 0.0.40
codegen_flags: <defaults>
</compile_context>

<pallas_src>
import jax
import jax.numpy as jnp
from jax.experimental import pallas as pl
from jax.experimental.pallas import tpu as pltpu


_LANE = 128                      # hidden dim padded to a multiple of this
_ROW_BASE = 256                  # node count padded to a multiple of this
_TM_TARGET = 2048                # target output-row tile
_TK_TARGET = 2048                # target reduction tile
_VMEM_LIMIT_BYTES = 48 * 1024 * 1024   # fits v7x (64 MiB physical); ample on v5e/v6e


def _round_up(x, m):
    return ((x + m - 1) // m) * m


def _pick_tile(n_pad, target):
    """Largest multiple of _ROW_BASE that divides n_pad and is <= target."""
    best = min(_ROW_BASE, n_pad)
    t = _ROW_BASE
    while t <= min(target, n_pad):
        if n_pad % t == 0:
            best = t
        t += _ROW_BASE
    return best


def _pick_tiles(n_pad):
    tm_cap = _TM_TARGET
    if n_pad >= 2 * _ROW_BASE:
        # Keep at least two row tiles so the "parallel" axis can use both v7x cores.
        tm_cap = min(tm_cap, n_pad // 2)
    return _pick_tile(n_pad, tm_cap), _pick_tile(n_pad, _TK_TARGET)


# ----------------------------- Pallas kernels ------------------------------ #

def _ngcf_layer_kernel(lap_ref, ek_ref, ei_ref, w1t_ref, b1_ref, w2t_ref, b2_ref,
                       out_ref, acc_ref):
    """One NGCF propagation layer, tiled over (row tile i, reduction tile k)."""
    k = pl.program_id(1)

    @pl.when(k == 0)
    def _init():
        acc_ref[...] = jnp.zeros_like(acc_ref)

    # A[i] += L[i, k] @ E[k]   (bf16 operands, f32 accumulation on the MXU)
    acc_ref[...] += jnp.dot(lap_ref[...], ek_ref[...],
                            preferred_element_type=jnp.float32)

    @pl.when(k == pl.num_programs(1) - 1)
    def _epilogue():
        a = acc_ref[...]                              # (TM, Hp) f32, == (L @ E)[i]
        e_i = ei_ref[...]                             # (TM, Hp) bf16
        # sx = Linear1((L + I) @ E) = (A + E) @ W1^T + b1   (bf16 MXU, f32 acc)
        lhs1 = (a + e_i.astype(jnp.float32)).astype(jnp.bfloat16)
        sx = jnp.dot(lhs1, w1t_ref[...],
                     preferred_element_type=jnp.float32) + b1_ref[...]
        # ox = (L @ E) * Linear2(E)                         (bf16 MXU, f32 acc)
        ox = a * (jnp.dot(e_i, w2t_ref[...],
                          preferred_element_type=jnp.float32) + b2_ref[...])
        z = sx + ox
        # F.leaky_relu default negative_slope = 0.01; store bf16 directly.
        out_ref[...] = jnp.where(z >= 0.0, z, 0.01 * z).astype(out_ref.dtype)


def _bpr_loss_kernel(u_ref, p_ref, n_ref, out_ref):
    """BPR loss: sum(-log(sigmoid(<u,p> - <u,n>))) == sum(softplus(neg - pos))."""
    u = u_ref[...]                                                 # (B, Dp)
    pos_logits = jnp.sum(u * p_ref[...], axis=-1, keepdims=True)   # (B, 1)
    neg_logits = jnp.sum(u * n_ref[...], axis=-1, keepdims=True)   # (B, 1)
    x = pos_logits - neg_logits
    # Numerically stable softplus(-x) = max(-x, 0) + log(1 + exp(-|x|)).
    loss = jnp.maximum(-x, 0.0) + jnp.log(1.0 + jnp.exp(-jnp.abs(x)))
    out_ref[0, 0] = jnp.sum(loss)


# ------------------------------ Pallas wrappers ----------------------------- #

def ngcf_layer(lap_bf16, emb_bf16, w1t_bf16, b1_pad, w2t_bf16, b2_pad, *, tm, tk):
    """emb' = leaky_relu(Linear1((L+I)@E) + (L@E)*Linear2(E)); padded bf16 layout."""
    n_pad, hp = emb_bf16.shape
    grid = (n_pad // tm, n_pad // tk)

    return pl.pallas_call(
        _ngcf_layer_kernel,
        out_shape=jax.ShapeDtypeStruct((n_pad, hp), jnp.bfloat16),
        grid_spec=pltpu.PrefetchScalarGridSpec(
            num_scalar_prefetch=0,
            grid=grid,
            in_specs=[
                # L tile streamed from HBM (dominant stream, bf16).
                pl.BlockSpec((tm, tk), lambda i, k: (i, k)),
                # E rows for the reduction (advance with k).
                pl.BlockSpec((tk, hp), lambda i, k: (k, 0)),
                # E rows matching the output tile (epilogue "+ E" / Linear2(E)).
                pl.BlockSpec((tm, hp), lambda i, k: (i, 0)),
                # Weights / biases: resident, DMA'd once (constant block index).
                pl.BlockSpec((hp, hp), lambda i, k: (0, 0)),
                pl.BlockSpec((1, hp), lambda i, k: (0, 0)),
                pl.BlockSpec((hp, hp), lambda i, k: (0, 0)),
                pl.BlockSpec((1, hp), lambda i, k: (0, 0)),
            ],
            out_specs=pl.BlockSpec((tm, hp), lambda i, k: (i, 0)),
            scratch_shapes=[pltpu.VMEM((tm, hp), jnp.float32)],
        ),
        compiler_params=pltpu.CompilerParams(
            dimension_semantics=("parallel", "arbitrary"),
            vmem_limit_bytes=_VMEM_LIMIT_BYTES,
        ),
    )(lap_bf16, emb_bf16, emb_bf16, w1t_bf16, b1_pad, w2t_bf16, b2_pad)


def prepare_laplacian(laplacian):
    """One-time pad + bf16 cast of the dense laplacian (keep out of the hot loop)."""
    n = laplacian.shape[0]
    n_pad = _round_up(n, _ROW_BASE)
    lap = jnp.zeros((n_pad, n_pad), jnp.float32).at[:n, :n].set(laplacian)
    return lap.astype(jnp.bfloat16)


@jax.jit
def ngcf_forward(emb0, lap_bf16, w1s, b1s, w2s, b2s, user, pos, neg):
    """Mirrors NGCF_matrix.forward with user/pos/neg provided -> scalar loss."""
    n, h = emb0.shape
    hp = _round_up(h, _LANE)
    n_pad = lap_bf16.shape[0]
    tm, tk = _pick_tiles(n_pad)

    # Zero-pad embeddings once (padded rows & columns stay inert).
    emb_pad = jnp.zeros((n_pad, hp), jnp.float32).at[:n, :h].set(emb0)

    def gather(e):
        return (e[user, :h].astype(jnp.float32),
                e[pos, :h].astype(jnp.float32),
                e[neg, :h].astype(jnp.float32))

    ue, pe, ne = gather(emb_pad)
    user_embs, pos_embs, neg_embs = [ue], [pe], [ne]

    emb = emb_pad.astype(jnp.bfloat16)        # single cast; layers emit bf16 directly
    for w1, b1, w2, b2 in zip(w1s, b1s, w2s, b2s):
        # Pre-transpose + zero-pad + bf16-cast Linear weights; biases stay f32.
        w1t = jnp.zeros((hp, hp), jnp.float32).at[:h, :h].set(w1.T).astype(jnp.bfloat16)
        b1p = jnp.zeros((1, hp), jnp.float32).at[0, :h].set(b1)
        w2t = jnp.zeros((hp, hp), jnp.float32).at[:h, :h].set(w2.T).astype(jnp.bfloat16)
        b2p = jnp.zeros((1, hp), jnp.float32).at[0, :h].set(b2)
        emb = ngcf_layer(lap_bf16, emb, w1t, b1p, w2t, b2p, tm=tm, tk=tk)
        ue, pe, ne = gather(emb)
        user_embs.append(ue)
        pos_embs.append(pe)
        neg_embs.append(ne)

    user_emb = jnp.concatenate(user_embs, axis=-1)
    pos_emb = jnp.concatenate(pos_embs, axis=-1)
    neg_emb = jnp.concatenate(neg_embs, axis=-1)

    # Pad the concatenated feature axis to a lane-dense multiple of 128; zero
    # columns contribute nothing to the dot products.
    d = user_emb.shape[-1]
    dp = _round_up(d, _LANE)

    def pad_feat(x):
        return jnp.zeros((x.shape[0], dp), jnp.float32).at[:, :d].set(x)

    loss = pl.pallas_call(
        _bpr_loss_kernel,
        out_shape=jax.ShapeDtypeStruct((1, 1), jnp.float32),
        in_specs=[pl.BlockSpec(memory_space=pltpu.MemorySpace.VMEM)] * 3,
        out_specs=pl.BlockSpec(memory_space=pltpu.MemorySpace.SMEM),
    )(pad_feat(user_emb), pad_feat(pos_emb), pad_feat(neg_emb))
    return loss[0, 0]


# ---------------------------------- main ------------------------------------ #

if __name__ == "__main__":
    # Small, forward-consistent config.
    user_num = 24
    item_num = 40
    hidden_size = 32
    layers_num = 2
    batch = 8

    N = user_num + item_num

    key = jax.random.PRNGKey(0)
    keys = jax.random.split(key, 4 + 4 * layers_num)

    # Deterministic parameter init (synthetic; shapes match nn.Embedding / nn.Linear).
    emb0 = jax.random.normal(keys[0], (N, hidden_size), dtype=jnp.float32) * 0.1
    laplacian = jax.random.normal(keys[1], (N, N), dtype=jnp.float32) * (1.0 / N)

    w1s, b1s, w2s, b2s = [], [], [], []
    for layer in range(layers_num):
        k0, k1, k2, k3 = keys[4 + 4 * layer: 8 + 4 * layer]
        scale = 1.0 / jnp.sqrt(hidden_size)
        w1s.append(jax.random.uniform(k0, (hidden_size, hidden_size),
                                      minval=-scale, maxval=scale,
                                      dtype=jnp.float32))
        b1s.append(jax.random.uniform(k1, (hidden_size,),
                                      minval=-scale, maxval=scale,
                                      dtype=jnp.float32))
        w2s.append(jax.random.uniform(k2, (hidden_size, hidden_size),
                                      minval=-scale, maxval=scale,
                                      dtype=jnp.float32))
        b2s.append(jax.random.uniform(k3, (hidden_size,),
                                      minval=-scale, maxval=scale,
                                      dtype=jnp.float32))

    # Deterministic user / positive-item / negative-item index batches.
    user = jax.random.randint(keys[2], (batch,), 0, user_num)
    pos = user_num + jax.random.randint(keys[3], (batch,), 0, item_num)
    neg = user_num + ((pos - user_num + 7) % item_num)

    # Laplacian padding / bf16 cast done once, outside the jitted forward.
    lap_bf16 = prepare_laplacian(laplacian)

    loss = ngcf_forward(emb0, lap_bf16, w1s, b1s, w2s, b2s, user, pos, neg)
    jax.block_until_ready(loss)

    # Pure-JAX f32 reference (original-module math, no Pallas).  The kernel streams
    # L/E in bf16 with f32 accumulation and stores bf16 layer outputs, so compare
    # at mixed-precision tolerance.
    def ref_forward():
        e = emb0
        ue, pe, ne = [e[user]], [e[pos]], [e[neg]]
        ident = jnp.eye(N, dtype=jnp.float32)
        for w1, b1, w2, b2 in zip(w1s, b1s, w2s, b2s):
            sx = (laplacian + ident) @ e @ w1.T + b1
            ox = (laplacian @ e) * (e @ w2.T + b2)
            z = sx + ox
            e = jnp.where(z >= 0, z, 0.01 * z)
            ue.append(e[user])
            pe.append(e[pos])
            ne.append(e[neg])
        u = jnp.concatenate(ue, -1)
        p = jnp.concatenate(pe, -1)
        nn_ = jnp.concatenate(ne, -1)
        x = jnp.sum(u * p, -1) - jnp.sum(u * nn_, -1)
        return jnp.sum(-jnp.log(jax.nn.sigmoid(x)))

    ref = ref_forward()
    assert jnp.isfinite(loss), loss
    assert jnp.allclose(loss, ref, rtol=2e-2, atol=2e-2), (loss, ref)

    print("KERNEL_OK")
</pallas_src>

<mosaic_0001>
module attributes {stable_mosaic.version = 11 : i64} {
  func.func @_ngcf_layer_kernel(%arg0: i32, %arg1: i32, %arg2: memref<256x256xbf16, #tpu.memory_space<vmem>>, %arg3: memref<256x128xbf16, #tpu.memory_space<vmem>>, %arg4: memref<256x128xbf16, #tpu.memory_space<vmem>>, %arg5: memref<128x128xbf16, #tpu.memory_space<vmem>>, %arg6: memref<1x128xf32, #tpu.memory_space<vmem>>, %arg7: memref<128x128xbf16, #tpu.memory_space<vmem>>, %arg8: memref<1x128xf32, #tpu.memory_space<vmem>>, %arg9: memref<256x128xbf16, #tpu.memory_space<vmem>>, %arg10: memref<256x128xf32, #tpu.memory_space<vmem>>) attributes {dimension_semantics = [#tpu.dimension_semantics<parallel>, #tpu.dimension_semantics<arbitrary>], iteration_bounds = array<i64: 1, 1>, scalar_prefetch = 0 : i64, scratch_operands = 1 : i64, tpu.core_type = #tpu.core_type<tc>, window_params = [{transform_indices = @transform_0, window_bounds = array<i64: 256, 256>}, {transform_indices = @transform_1, window_bounds = array<i64: 256, 128>}, {transform_indices = @transform_2, window_bounds = array<i64: 256, 128>}, {pipeline_mode = #tpu.pipeline_mode<synchronous>, transform_indices = @transform_3, window_bounds = array<i64: 128, 128>}, {pipeline_mode = #tpu.pipeline_mode<synchronous>, transform_indices = @transform_4, window_bounds = array<i64: 1, 128>}, {pipeline_mode = #tpu.pipeline_mode<synchronous>, transform_indices = @transform_5, window_bounds = array<i64: 128, 128>}, {pipeline_mode = #tpu.pipeline_mode<synchronous>, transform_indices = @transform_6, window_bounds = array<i64: 1, 128>}, {transform_indices = @transform_7, window_bounds = array<i64: 256, 128>}]} {
    %c0_i32 = arith.constant 0 : i32
    %0 = arith.cmpi eq, %arg1, %c0_i32 : i32
    %1 = arith.extui %0 : i1 to i32
    %c0_i32_0 = arith.constant 0 : i32
    %2 = arith.cmpi ne, %1, %c0_i32_0 : i32
    scf.if %2 {
      %cst_10 = arith.constant 0.000000e+00 : f32
      %12 = vector.broadcast %cst_10 : f32 to vector<256x128xf32>
      %c0_11 = arith.constant 0 : index
      %c0_12 = arith.constant 0 : index
      %13 = vector.load %arg10[%c0_11, %c0_12] : memref<256x128xf32, #tpu.memory_space<vmem>>, vector<256x128xf32>
      tpu.vector_store %arg10[%c0_11, %c0_12], %12 {strides = array<i32>} : memref<256x128xf32, #tpu.memory_space<vmem>>, vector<256x128xf32>,
    } else {
    }
    %c0 = arith.constant 0 : index
    %c0_1 = arith.constant 0 : index
    %3 = vector.load %arg10[%c0, %c0_1] : memref<256x128xf32, #tpu.memory_space<vmem>>, vector<256x128xf32>
    %c0_2 = arith.constant 0 : index
    %c0_3 = arith.constant 0 : index
    %4 = vector.load %arg2[%c0_2, %c0_3] : memref<256x256xbf16, #tpu.memory_space<vmem>>, vector<256x256xbf16>
    %c0_4 = arith.constant 0 : index
    %c0_5 = arith.constant 0 : index
    %5 = vector.load %arg3[%c0_4, %c0_5] : memref<256x128xbf16, #tpu.memory_space<vmem>>, vector<256x128xbf16>
    %cst = arith.constant dense<0.000000e+00> : vector<256x128xf32>
    %6 = tpu.matmul %4, %5, %cst {dimension_numbers = #tpu.dot_dimension_numbers<[1], [0], [0], [1], [0, 0, 1, 1], [], []>} : vector<256x256xbf16>, vector<256x128xbf16>, vector<256x128xf32> -> vector<256x128xf32>
    %7 = arith.addf %3, %6 : vector<256x128xf32>
    %c0_6 = arith.constant 0 : index
    %c0_7 = arith.constant 0 : index
    %8 = vector.load %arg10[%c0_6, %c0_7] : memref<256x128xf32, #tpu.memory_space<vmem>>, vector<256x128xf32>
    tpu.vector_store %arg10[%c0_6, %c0_7], %7 {strides = array<i32>} : memref<256x128xf32, #tpu.memory_space<vmem>>, vector<256x128xf32>,
    %c0_i32_8 = arith.constant 0 : i32
    %9 = arith.cmpi eq, %arg1, %c0_i32_8 : i32
    %10 = arith.extui %9 : i1 to i32
    %c0_i32_9 = arith.constant 0 : i32
    %11 = arith.cmpi ne, %10, %c0_i32_9 : i32
    scf.if %11 {
      %c0_10 = arith.constant 0 : index
      %c0_11 = arith.constant 0 : index
      %12 = vector.load %arg10[%c0_10, %c0_11] : memref<256x128xf32, #tpu.memory_space<vmem>>, vector<256x128xf32>
      %c0_12 = arith.constant 0 : index
      %c0_13 = arith.constant 0 : index
      %13 = vector.load %arg4[%c0_12, %c0_13] : memref<256x128xbf16, #tpu.memory_space<vmem>>, vector<256x128xbf16>
      %14 = arith.extf %13 : vector<256x128xbf16> to vector<256x128xf32>
      %15 = arith.addf %12, %14 : vector<256x128xf32>
      %16 = arith.truncf %15 : vector<256x128xf32> to vector<256x128xbf16>
      %c0_14 = arith.constant 0 : index
      %c0_15 = arith.constant 0 : index
      %17 = vector.load %arg5[%c0_14, %c0_15] : memref<128x128xbf16, #tpu.memory_space<vmem>>, vector<128x128xbf16>
      %cst_16 = arith.constant dense<0.000000e+00> : vector<256x128xf32>
      %18 = tpu.matmul %16, %17, %cst_16 {dimension_numbers = #tpu.dot_dimension_numbers<[1], [0], [0], [1], [0, 0, 1, 1], [], []>} : vector<256x128xbf16>, vector<128x128xbf16>, vector<256x128xf32> -> vector<256x128xf32>
      %c0_17 = arith.constant 0 : index
      %c0_18 = arith.constant 0 : index
      %19 = vector.load %arg6[%c0_17, %c0_18] : memref<1x128xf32, #tpu.memory_space<vmem>>, vector<1x128xf32>
      %20 = vector.broadcast %19 : vector<1x128xf32> to vector<256x128xf32>
      %21 = arith.addf %18, %20 : vector<256x128xf32>
      %c0_19 = arith.constant 0 : index
      %c0_20 = arith.constant 0 : index
      %22 = vector.load %arg7[%c0_19, %c0_20] : memref<128x128xbf16, #tpu.memory_space<vmem>>, vector<128x128xbf16>
      %cst_21 = arith.constant dense<0.000000e+00> : vector<256x128xf32>
      %23 = tpu.matmul %13, %22, %cst_21 {dimension_numbers = #tpu.dot_dimension_numbers<[1], [0], [0], [1], [0, 0, 1, 1], [], []>} : vector<256x128xbf16>, vector<128x128xbf16>, vector<256x128xf32> -> vector<256x128xf32>
      %c0_22 = arith.constant 0 : index
      %c0_23 = arith.constant 0 : index
      %24 = vector.load %arg8[%c0_22, %c0_23] : memref<1x128xf32, #tpu.memory_space<vmem>>, vector<1x128xf32>
      %25 = vector.broadcast %24 : vector<1x128xf32> to vector<256x128xf32>
      %26 = arith.addf %23, %25 : vector<256x128xf32>
      %27 = arith.mulf %12, %26 : vector<256x128xf32>
      %28 = arith.addf %21, %27 : vector<256x128xf32>
      %cst_24 = arith.constant 0.000000e+00 : f32
      %29 = vector.broadcast %cst_24 : f32 to vector<256x128xf32>
      %30 = arith.cmpf oge, %28, %29 : vector<256x128xf32>
      %cst_25 = arith.constant 0.00999999977 : f32
      %31 = vector.broadcast %cst_25 : f32 to vector<256x128xf32>
      %32 = arith.mulf %31, %28 : vector<256x128xf32>
      %33 = arith.select %30, %28, %32 : vector<256x128xi1>, vector<256x128xf32>
      %34 = arith.truncf %33 : vector<256x128xf32> to vector<256x128xbf16>
      %c0_26 = arith.constant 0 : index
      %c0_27 = arith.constant 0 : index
      %35 = vector.load %arg9[%c0_26, %c0_27] : memref<256x128xbf16, #tpu.memory_space<vmem>>, vector<256x128xbf16>
      tpu.vector_store %arg9[%c0_26, %c0_27], %34 {strides = array<i32>} : memref<256x128xbf16, #tpu.memory_space<vmem>>, vector<256x128xbf16>,
    } else {
    }
    return
  }
  func.func @transform_0(%arg0: i32, %arg1: i32) -> (i32, i32) {
    %c0_i32 = arith.constant 0 : i32
    return %arg0, %arg1 : i32, i32
  }
  func.func @transform_1(%arg0: i32, %arg1: i32) -> (i32, i32) {
    %c0_i32 = arith.constant 0 : i32
    %c0_i32_0 = arith.constant 0 : i32
    return %arg1, %c0_i32 : i32, i32
  }
  func.func @transform_2(%arg0: i32, %arg1: i32) -> (i32, i32) {
    %c0_i32 = arith.constant 0 : i32
    %c0_i32_0 = arith.constant 0 : i32
    return %arg0, %c0_i32 : i32, i32
  }
  func.func @transform_3(%arg0: i32, %arg1: i32) -> (i32, i32) {
    %c0_i32 = arith.constant 0 : i32
    %c0_i32_0 = arith.constant 0 : i32
    %c0_i32_1 = arith.constant 0 : i32
    return %c0_i32, %c0_i32_0 : i32, i32
  }
  func.func @transform_4(%arg0: i32, %arg1: i32) -> (i32, i32) {
    %c0_i32 = arith.constant 0 : i32
    %c0_i32_0 = arith.constant 0 : i32
    %c0_i32_1 = arith.constant 0 : i32
    return %c0_i32, %c0_i32_0 : i32, i32
  }
  func.func @transform_5(%arg0: i32, %arg1: i32) -> (i32, i32) {
    %c0_i32 = arith.constant 0 : i32
    %c0_i32_0 = arith.constant 0 : i32
    %c0_i32_1 = arith.constant 0 : i32
    return %c0_i32, %c0_i32_0 : i32, i32
  }
  func.func @transform_6(%arg0: i32, %arg1: i32) -> (i32, i32) {
    %c0_i32 = arith.constant 0 : i32
    %c0_i32_0 = arith.constant 0 : i32
    %c0_i32_1 = arith.constant 0 : i32
    return %c0_i32, %c0_i32_0 : i32, i32
  }
  func.func @transform_7(%arg0: i32, %arg1: i32) -> (i32, i32) {
    %c0_i32 = arith.constant 0 : i32
    %c0_i32_0 = arith.constant 0 : i32
    return %arg0, %c0_i32 : i32, i32
  }
}

module attributes {stable_mosaic.version = 11 : i64} {
  func.func @_bpr_loss_kernel(%arg0: memref<8x128xf32, #tpu.memory_space<vmem>>, %arg1: memref<8x128xf32, #tpu.memory_space<vmem>>, %arg2: memref<8x128xf32, #tpu.memory_space<vmem>>, %arg3: memref<1x1xf32, #tpu.memory_space<smem>>) attributes {dimension_semantics = [], scalar_prefetch = 0 : i64, scratch_operands = 0 : i64, tpu.core_type = #tpu.core_type<tc>} {
    %c0 = arith.constant 0 : index
    %c0_0 = arith.constant 0 : index
    %0 = vector.load %arg0[%c0, %c0_0] : memref<8x128xf32, #tpu.memory_space<vmem>>, vector<8x128xf32>
    %c0_1 = arith.constant 0 : index
    %c0_2 = arith.constant 0 : index
    %1 = vector.load %arg1[%c0_1, %c0_2] : memref<8x128xf32, #tpu.memory_space<vmem>>, vector<8x128xf32>
    %2 = arith.mulf %0, %1 : vector<8x128xf32>
    %cst = arith.constant dense<0.000000e+00> : vector<8xf32>
    %3 = vector.multi_reduction <add>, %2, %cst [1] : vector<8x128xf32> to vector<8xf32>
    %4 = vector.shape_cast %3 : vector<8xf32> to vector<8x1xf32>
    %c0_3 = arith.constant 0 : index
    %c0_4 = arith.constant 0 : index
    %5 = vector.load %arg2[%c0_3, %c0_4] : memref<8x128xf32, #tpu.memory_space<vmem>>, vector<8x128xf32>
    %6 = arith.mulf %0, %5 : vector<8x128xf32>
    %cst_5 = arith.constant dense<0.000000e+00> : vector<8xf32>
    %7 = vector.multi_reduction <add>, %6, %cst_5 [1] : vector<8x128xf32> to vector<8xf32>
    %8 = vector.shape_cast %7 : vector<8xf32> to vector<8x1xf32>
    %9 = arith.subf %4, %8 : vector<8x1xf32>
    %cst_6 = arith.constant 0.000000e+00 : f32
    %10 = vector.broadcast %cst_6 : f32 to vector<8x1xf32>
    %11 = arith.subf %10, %9 : vector<8x1xf32>
    %cst_7 = arith.constant 0.000000e+00 : f32
    %12 = vector.broadcast %cst_7 : f32 to vector<8x1xf32>
    %13 = arith.maximumf %11, %12 : vector<8x1xf32>
    %14 = math.absf %9 : vector<8x1xf32>
    %cst_8 = arith.constant 0.000000e+00 : f32
    %15 = vector.broadcast %cst_8 : f32 to vector<8x1xf32>
    %16 = arith.subf %15, %14 : vector<8x1xf32>
    %17 = math.exp %16 : vector<8x1xf32>
    %cst_9 = arith.constant 1.000000e+00 : f32
    %18 = vector.broadcast %cst_9 : f32 to vector<8x1xf32>
    %19 = arith.addf %18, %17 : vector<8x1xf32>
    %20 = math.log %19 : vector<8x1xf32>
    %21 = arith.addf %13, %20 : vector<8x1xf32>
    %22 = vector.shape_cast %21 : vector<8x1xf32> to vector<1x8x1xf32>
    %cst_10 = arith.constant dense<0.000000e+00> : vector<1xf32>
    %23 = vector.multi_reduction <add>, %22, %cst_10 [1, 2] : vector<1x8x1xf32> to vector<1xf32>
    %24 = vector.shape_cast %23 : vector<1xf32> to vector<1x1x1xf32>
    %25 = vector.extract %24[0, 0, 0] : f32 from vector<1x1x1xf32>
    %c0_11 = arith.constant 0 : index
    %c0_12 = arith.constant 0 : index
    %26 = memref.load %arg3[%c0_11, %c0_12] : memref<1x1xf32, #tpu.memory_space<smem>>
    memref.store %25, %arg3[%c0_11, %c0_12] : memref<1x1xf32, #tpu.memory_space<smem>>
    return
  }
}

</mosaic_0001>

<llo_original>
// kernel: ngcf_forward.5
$region0: #{ngcf_forward.5}
  #allocation0 [shape = 'u32[]', space=smem, size = 0x4, offset = 0x4, fixed_abs, tag = 'smem constant byte address 0x4 - core index']
  #allocation1 [shape = 'u32[144,128]{1,0:T(1,128)}', space=vmem, size = 0x12000, scoped, tag = 'internal scratch']
  %s0 = inlined_call_operand.vmem [shape: f32[8,128], index: 0, kind: input, shape index: {}]
  %s1 = inlined_call_operand.vmem [shape: f32[8,128], index: 1, kind: input, shape index: {}]
  %s2 = inlined_call_operand.vmem [shape: f32[8,128], index: 2, kind: input, shape index: {}]
  %s3 = inlined_call_operand.hbm [shape: f32[1,1], index: 3, kind: output, shape index: {}]
  %s4 = sld [smem:[#allocation0]]
  $region22: #{ngcf_forward.5} parent=0
    _
  %s6 = ssub.s32 1, %s4
  %s7 = scalar_select 0, %s6, %s4
  $region1: #{ngcf_forward.5} parent=0
    #allocation2 [shape = 'u8[512]{0}', space=smem, size = 0x200, scoped, tag = 'output window, operand 0, single buffered']
    #allocation3 [shape = 's32[1]{0}', space=sflag, size = 0x4, scoped, tag = 'scoped memory for ngcf_forward.5']
    %8 = vsyncpa [#allocation3], 0
    // Predicated region
    $region2: #{ngcf_forward.5} parent=1 // pred_check
      _
    $region3: #{ngcf_forward.5} parent=1 // pred_check_branch
      %10 = sbr.rel (0) target = $region5
    $region4: #{ngcf_forward.5} parent=1 // pred_region
      _
    $region5: #{ngcf_forward.5} parent=1 // pred_fallthru
      _
    // Predicated region
    $region6: #{ngcf_forward.5} parent=1 // pred_check
      _
    $region7: #{ngcf_forward.5} parent=1 // pred_check_branch
      %12 = sbr.rel (0) target = $region9
    $region8: #{ngcf_forward.5} parent=1 // pred_region
      _
    $region9: #{ngcf_forward.5} parent=1 // pred_fallthru
      _
    // Predicated region
    $region10: #{ngcf_forward.5} parent=1 // pred_check
      _
    $region11: #{ngcf_forward.5} parent=1 // pred_check_branch
      %14 = sbr.rel (0) target = $region13
    $region12: #{ngcf_forward.5} parent=1 // pred_region
      _
    $region13: #{ngcf_forward.5} parent=1 // pred_fallthru
      _
    %v15 = vld [vmem:[%s0] sm:$0xff]
    %v16 = vld [vmem:[%s1] sm:$0xff]
    %v17 = vmul.f32 %v15, %v16
    %18 = vadd.xlane.f32.xlu0 %v17
    %v19 = vpop.xlane.xlu0 %18
    %v20 = vld [vmem:[%s2] sm:$0xff]
    %v21 = vmul.f32 %v15, %v20
    %22 = vadd.xlane.f32.xlu0 %v21
    %v23 = vpop.xlane.xlu0 %22
    %v24 = vsub.f32 %v19, %v23
    %v25 = vsub.f32 0.0, %v24
    %v26 = vmax.f32 %v25, 0.0
    %v27 = vand.u32 2147483647, %v24
    %v28 = vsub.f32 0.0, %v27
    %v29 = vmul.f32 %v28, 1.442695
    %v30 = vpow.pop %v29
    %v31 = vadd.f32 %v30, 1.0
    %v32 = vlog2.pop %v31
    %v33 = vmul.f32 %v32, 0.6931472
    %v34 = vadd.f32 %v26, %v33
    %vm35 = vcmask 7168
    %v36 = vsel %vm35, %v34, 0.0
    %37 = vadd.xlane.f32.xlu0 %v36
    %v38 = vpop.xlane.xlu0 %37
    %v39 = vrot.slane %v38, 4
    %v40 = vadd.f32 %v38, %v39
    %v41 = vrot.slane %v40, 2
    %v42 = vadd.f32 %v40, %v41
    %v43 = vrot.slane %v42, 1
    %v44 = vadd.f32 %v42, %v43
    %s45 = vtos %v44
    %s46 = scalar_lea.smem [#allocation2], 0
    %47 = sst [smem:[%s46]] %s45
    // Predicated region
    $region14: #{ngcf_forward.5} parent=1 // pred_check
      _
    $region15: #{ngcf_forward.5} parent=1 // pred_check_branch
      %49 = sbr.rel (0) target = $region17
    $region16: #{ngcf_forward.5} parent=1 // pred_region
      %s51 = ssub.s32 16, 16
      %52 = vsyncadd [#allocation3], %s51
      %55 = dma.smem_to_hbm [#allocation2], 16, %s3, [#allocation3]
    $region17: #{ngcf_forward.5} parent=1 // pred_fallthru
      _
    // Predicated region
    $region18: #{ngcf_forward.5} parent=1 // pred_check
      _
    $region19: #{ngcf_forward.5} parent=1 // pred_check_branch
      %57 = sbr.rel (0) target = $region21
    $region20: #{ngcf_forward.5} parent=1 // pred_region
      %58 = dma.done [#allocation3], 16
    $region21: #{ngcf_forward.5} parent=1 // pred_fallthru
      _
    %59 = sfence
    %60 = vsyncpa [#allocation3], 1

// kernel: ngcf_forward.3
$region0: #{ngcf_forward.3}
  #allocation0 [shape = 'u32[]', space=smem, size = 0x4, offset = 0x4, fixed_abs, tag = 'smem constant byte address 0x4 - core index']
  #allocation1 [shape = 'u32[144,128]{1,0:T(1,128)}', space=vmem, size = 0x12000, scoped, tag = 'internal scratch']
  #allocation2 [shape = 'f32[256,128]{1,0:T(8,128)}', space=vmem, size = 0x20000, scoped, tag = 'scratch operand']
  %s0 = inlined_call_operand.vmem [shape: bf16[256,256], index: 0, kind: input, shape index: {}]
  %s1 = inlined_call_operand.vmem [shape: bf16[256,128], index: 1, kind: input, shape index: {}, may-alias: {1,2}]
  %s2 = inlined_call_operand.vmem [shape: bf16[256,128], index: 2, kind: input, shape index: {}, may-alias: {1,2}]
  %s3 = inlined_call_operand.vmem [shape: bf16[128,128], index: 3, kind: input, shape index: {}]
  %s4 = inlined_call_operand.vmem [shape: f32[1,128], index: 4, kind: input, shape index: {}]
  %s5 = inlined_call_operand.vmem [shape: bf16[128,128], index: 5, kind: input, shape index: {}]
  %s6 = inlined_call_operand.vmem [shape: f32[1,128], index: 6, kind: input, shape index: {}]
  %s7 = inlined_call_operand.vmem [shape: bf16[256,128], index: 7, kind: output, shape index: {}]
  %s8 = sld [smem:[#allocation0]]
  $region46: #{ngcf_forward.3} parent=0
    _
  %s10 = ssub.s32 1, %s8
  %s11 = scalar_select 0, %s10, %s8
  // Predicated region
  $region2: #{ngcf_forward.3} parent=0 // pred_check
    _
  $region3: #{ngcf_forward.3} parent=0 // pred_check_branch
    %13 = sbr.rel (0) target = $region5
  $region4: #{ngcf_forward.3} parent=0 // pred_region
    _
  $region5: #{ngcf_forward.3} parent=0 // pred_fallthru
    _
  // Predicated region
  $region6: #{ngcf_forward.3} parent=0 // pred_check
    _
  $region7: #{ngcf_forward.3} parent=0 // pred_check_branch
    %15 = sbr.rel (0) target = $region9
  $region8: #{ngcf_forward.3} parent=0 // pred_region
    _
  $region9: #{ngcf_forward.3} parent=0 // pred_fallthru
    _
  // Predicated region
  $region10: #{ngcf_forward.3} parent=0 // pred_check
    _
  $region11: #{ngcf_forward.3} parent=0 // pred_check_branch
    %17 = sbr.rel (0) target = $region13
  $region12: #{ngcf_forward.3} parent=0 // pred_region
    _
  $region13: #{ngcf_forward.3} parent=0 // pred_fallthru
    _
  // Predicated region
  $region14: #{ngcf_forward.3} parent=0 // pred_check
    _
  $region15: #{ngcf_forward.3} parent=0 // pred_check_branch
    %19 = sbr.rel (0) target = $region17
  $region16: #{ngcf_forward.3} parent=0 // pred_region
    _
  $region17: #{ngcf_forward.3} parent=0 // pred_fallthru
    _
  // Predicated region
  $region18: #{ngcf_forward.3} parent=0 // pred_check
    _
  $region19: #{ngcf_forward.3} parent=0 // pred_check_branch
    %21 = sbr.rel (0) target = $region21
  $region20: #{ngcf_forward.3} parent=0 // pred_region
    _
  $region21: #{ngcf_forward.3} parent=0 // pred_fallthru
    _
  // Predicated region
  $region22: #{ngcf_forward.3} parent=0 // pred_check
    _
  $region23: #{ngcf_forward.3} parent=0 // pred_check_branch
    %23 = sbr.rel (0) target = $region25
  $region24: #{ngcf_forward.3} parent=0 // pred_region
    _
  $region25: #{ngcf_forward.3} parent=0 // pred_fallthru
    _
  // Predicated region
  $region26: #{ngcf_forward.3} parent=0 // pred_check
    _
  $region27: #{ngcf_forward.3} parent=0 // pred_check_branch
    %25 = sbr.rel (0) target = $region29
  $region28: #{ngcf_forward.3} parent=0 // pred_region
    _
  $region29: #{ngcf_forward.3} parent=0 // pred_fallthru
    _
  %p27 = scmp.eq.s32.totalorder 0, 0
  // Predicated region
  $region30: #{ngcf_forward.3} parent=0 // pred_check
    %p28 = pneg %p27
  $region31: #{ngcf_forward.3} parent=0 // pred_check_branch
    %30 = sbr.rel (%p28) target = $region33
  $region32: #{ngcf_forward.3} parent=0 // pred_region
    %31 = vst [vmem:[#allocation2] sm:$0xff] 0.0
    %32 = vst [vmem:[#allocation2 + $0x8] sm:$0xff] 0.0
    %33 = vst [vmem:[#allocation2 + $0x10] sm:$0xff] 0.0
    %34 = vst [vmem:[#allocation2 + $0x18] sm:$0xff] 0.0
    %35 = vst [vmem:[#allocation2 + $0x20] sm:$0xff] 0.0
    %36 = vst [vmem:[#allocation2 + $0x28] sm:$0xff] 0.0
    %37 = vst [vmem:[#allocation2 + $0x30] sm:$0xff] 0.0
    %38 = vst [vmem:[#allocation2 + $0x38] sm:$0xff] 0.0
    %39 = vst [vmem:[#allocation2 + $0x40] sm:$0xff] 0.0
    %40 = vst [vmem:[#allocation2 + $0x48] sm:$0xff] 0.0
    %41 = vst [vmem:[#allocation2 + $0x50] sm:$0xff] 0.0
    %42 = vst [vmem:[#allocation2 + $0x58] sm:$0xff] 0.0
    %43 = vst [vmem:[#allocation2 + $0x60] sm:$0xff] 0.0
    %44 = vst [vmem:[#allocation2 + $0x68] sm:$0xff] 0.0
    %45 = vst [vmem:[#allocation2 + $0x70] sm:$0xff] 0.0
    %46 = vst [vmem:[#allocation2 + $0x78] sm:$0xff] 0.0
    %47 = vst [vmem:[#allocation2 + $0x80] sm:$0xff] 0.0
    %48 = vst [vmem:[#allocation2 + $0x88] sm:$0xff] 0.0
    %49 = vst [vmem:[#allocation2 + $0x90] sm:$0xff] 0.0
    %50 = vst [vmem:[#allocation2 + $0x98] sm:$0xff] 0.0
    %51 = vst [vmem:[#allocation2 + $0xa0] sm:$0xff] 0.0
    %52 = vst [vmem:[#allocation2 + $0xa8] sm:$0xff] 0.0
    %53 = vst [vmem:[#allocation2 + $0xb0] sm:$0xff] 0.0
    %54 = vst [vmem:[#allocation2 + $0xb8] sm:$0xff] 0.0
    %55 = vst [vmem:[#allocation2 + $0xc0] sm:$0xff] 0.0
    %56 = vst [vmem:[#allocation2 + $0xc8] sm:$0xff] 0.0
    %57 = vst [vmem:[#allocation2 + $0xd0] sm:$0xff] 0.0
    %58 = vst [vmem:[#allocation2 + $0xd8] sm:$0xff] 0.0
    %59 = vst [vmem:[#allocation2 + $0xe0] sm:$0xff] 0.0
    %60 = vst [vmem:[#allocation2 + $0xe8] sm:$0xff] 0.0
    %61 = vst [vmem:[#allocation2 + $0xf0] sm:$0xff] 0.0
    %62 = vst [vmem:[#allocation2 + $0xf8] sm:$0xff] 0.0
  $region33: #{ngcf_forward.3} parent=0 // pred_fallthru
    _
  %v63 = vld [vmem:[#allocation2] sm:$0xff]
  %v64 = vld [vmem:[#allocation2 + $0x8] sm:$0xff]
  %v65 = vld [vmem:[#allocation2 + $0x10] sm:$0xff]
  %v66 = vld [vmem:[#allocation2 + $0x18] sm:$0xff]
  %v67 = vld [vmem:[#allocation2 + $0x20] sm:$0xff]
  %v68 = vld [vmem:[#allocation2 + $0x28] sm:$0xff]
  %v69 = vld [vmem:[#allocation2 + $0x30] sm:$0xff]
  %v70 = vld [vmem:[#allocation2 + $0x38] sm:$0xff]
  %v71 = vld [vmem:[#allocation2 + $0x40] sm:$0xff]
  %v72 = vld [vmem:[#allocation2 + $0x48] sm:$0xff]
  %v73 = vld [vmem:[#allocation2 + $0x50] sm:$0xff]
  %v74 = vld [vmem:[#allocation2 + $0x58] sm:$0xff]
  %v75 = vld [vmem:[#allocation2 + $0x60] sm:$0xff]
  %v76 = vld [vmem:[#allocation2 + $0x68] sm:$0xff]
  %v77 = vld [vmem:[#allocation2 + $0x70] sm:$0xff]
  %v78 = vld [vmem:[#allocation2 + $0x78] sm:$0xff]
  %v79 = vld [vmem:[#allocation2 + $0x80] sm:$0xff]
  %v80 = vld [vmem:[#allocation2 + $0x88] sm:$0xff]
  %v81 = vld [vmem:[#allocation2 + $0x90] sm:$0xff]
  %v82 = vld [vmem:[#allocation2 + $0x98] sm:$0xff]
  %v83 = vld [vmem:[#allocation2 + $0xa0] sm:$0xff]
  %v84 = vld [vmem:[#allocation2 + $0xa8] sm:$0xff]
  %v85 = vld [vmem:[#allocation2 + $0xb0] sm:$0xff]
  %v86 = vld [vmem:[#allocation2 + $0xb8] sm:$0xff]
  %v87 = vld [vmem:[#allocation2 + $0xc0] sm:$0xff]
  %v88 = vld [vmem:[#allocation2 + $0xc8] sm:$0xff]
  %v89 = vld [vmem:[#allocation2 + $0xd0] sm:$0xff]
  %v90 = vld [vmem:[#allocation2 + $0xd8] sm:$0xff]
  %v91 = vld [vmem:[#allocation2 + $0xe0] sm:$0xff]
  %v92 = vld [vmem:[#allocation2 + $0xe8] sm:$0xff]
  %v93 = vld [vmem:[#allocation2 + $0xf0] sm:$0xff]
  %v94 = vld [vmem:[#allocation2 + $0xf8] sm:$0xff]
  %v95 = vld [vmem:[%s0] sm:$0xff]
  %v96 = vld [vmem:[%s0 + $0x8] sm:$0xff]
  %v97 = vld [vmem:[%s0 + $0x10] sm:$0xff]
  %v98 = vld [vmem:[%s0 + $0x18] sm:$0xff]
  %v99 = vld [vmem:[%s0 + $0x20] sm:$0xff]
  %v100 = vld [vmem:[%s0 + $0x28] sm:$0xff]
  %v101 = vld [vmem:[%s0 + $0x30] sm:$0xff]
  %v102 = vld [vmem:[%s0 + $0x38] sm:$0xff]
  %v103 = vld [vmem:[%s0 + $0x40] sm:$0xff]
  %v104 = vld [vmem:[%s0 + $0x48] sm:$0xff]
  %v105 = vld [vmem:[%s0 + $0x50] sm:$0xff]
  %v106 = vld [vmem:[%s0 + $0x58] sm:$0xff]
  %v107 = vld [vmem:[%s0 + $0x60] sm:$0xff]
  %v108 = vld [vmem:[%s0 + $0x68] sm:$0xff]
  %v109 = vld [vmem:[%s0 + $0x70] sm:$0xff]
  %v110 = vld [vmem:[%s0 + $0x78] sm:$0xff]
  %v111 = vld [vmem:[%s0 + $0x80] sm:$0xff]
  %v112 = vld [vmem:[%s0 + $0x88] sm:$0xff]
  %v113 = vld [vmem:[%s0 + $0x90] sm:$0xff]
  %v114 = vld [vmem:[%s0 + $0x98] sm:$0xff]
  %v115 = vld [vmem:[%s0 + $0xa0] sm:$0xff]
  %v116 = vld [vmem:[%s0 + $0xa8] sm:$0xff]
  %v117 = vld [vmem:[%s0 + $0xb0] sm:$0xff]
  %v118 = vld [vmem:[%s0 + $0xb8] sm:$0xff]
  %v119 = vld [vmem:[%s0 + $0xc0] sm:$0xff]
  %v120 = vld [vmem:[%s0 + $0xc8] sm:$0xff]
  %v121 = vld [vmem:[%s0 + $0xd0] sm:$0xff]
  %v122 = vld [vmem:[%s0 + $0xd8] sm:$0xff]
  %v123 = vld [vmem:[%s0 + $0xe0] sm:$0xff]
  %v124 = vld [vmem:[%s0 + $0xe8] sm:$0xff]
  %v125 = vld [vmem:[%s0 + $0xf0] sm:$0xff]
  %v126 = vld [vmem:[%s0 + $0xf8] sm:$0xff]
  %v127 = vld [vmem:[%s1] sm:$0xf]
  %v128 = vld [vmem:[%s1 + $0x4] sm:$0xf]
  %v129 = vld [vmem:[%s1 + $0x8] sm:$0xf]
  %v130 = vld [vmem:[%s1 + $0xc] sm:$0xf]
  %v131 = vld [vmem:[%s1 + $0x10] sm:$0xf]
  %v132 = vld [vmem:[%s1 + $0x14] sm:$0xf]
  %v133 = vld [vmem:[%s1 + $0x18] sm:$0xf]
  %v134 = vld [vmem:[%s1 + $0x1c] sm:$0xf]
  %v135 = vld [vmem:[%s1 + $0x20] sm:$0xf]
  %v136 = vld [vmem:[%s1 + $0x24] sm:$0xf]
  %v137 = vld [vmem:[%s1 + $0x28] sm:$0xf]
  %v138 = vld [vmem:[%s1 + $0x2c] sm:$0xf]
  %v139 = vld [vmem:[%s1 + $0x30] sm:$0xf]
  %v140 = vld [vmem:[%s1 + $0x34] sm:$0xf]
  %v141 = vld [vmem:[%s1 + $0x38] sm:$0xf]
  %v142 = vld [vmem:[%s1 + $0x3c] sm:$0xf]
  %v143 = vld [vmem:[%s1 + $0x40] sm:$0xf]
  %v144 = vld [vmem:[%s1 + $0x44] sm:$0xf]
  %v145 = vld [vmem:[%s1 + $0x48] sm:$0xf]
  %v146 = vld [vmem:[%s1 + $0x4c] sm:$0xf]
  %v147 = vld [vmem:[%s1 + $0x50] sm:$0xf]
  %v148 = vld [vmem:[%s1 + $0x54] sm:$0xf]
  %v149 = vld [vmem:[%s1 + $0x58] sm:$0xf]
  %v150 = vld [vmem:[%s1 + $0x5c] sm:$0xf]
  %v151 = vld [vmem:[%s1 + $0x60] sm:$0xf]
  %v152 = vld [vmem:[%s1 + $0x64] sm:$0xf]
  %v153 = vld [vmem:[%s1 + $0x68] sm:$0xf]
  %v154 = vld [vmem:[%s1 + $0x6c] sm:$0xf]
  %v155 = vld [vmem:[%s1 + $0x70] sm:$0xf]
  %v156 = vld [vmem:[%s1 + $0x74] sm:$0xf]
  %v157 = vld [vmem:[%s1 + $0x78] sm:$0xf]
  %v158 = vld [vmem:[%s1 + $0x7c] sm:$0xf]
  %v191 = vunpack.c.l.b16 %v95
  %v192 = vunpack.c.h.b16 %v95
  %v193 = vunpack.c.l.b16 %v96
  %v194 = vunpack.c.h.b16 %v96
  %v195 = vunpack.c.l.b16 %v97
  %v196 = vunpack.c.h.b16 %v97
  %v197 = vunpack.c.l.b16 %v98
  %v198 = vunpack.c.h.b16 %v98
  %v199 = vunpack.c.l.b16 %v99
  %v200 = vunpack.c.h.b16 %v99
  %v201 = vunpack.c.l.b16 %v100
  %v202 = vunpack.c.h.b16 %v100
  %v203 = vunpack.c.l.b16 %v101
  %v204 = vunpack.c.h.b16 %v101
  %v205 = vunpack.c.l.b16 %v102
  %v206 = vunpack.c.h.b16 %v102
  %v207 = vunpack.c.l.b16 %v103
  %v208 = vunpack.c.h.b16 %v103
  %v209 = vunpack.c.l.b16 %v104
  %v210 = vunpack.c.h.b16 %v104
  %v211 = vunpack.c.l.b16 %v105
  %v212 = vunpack.c.h.b16 %v105
  %v213 = vunpack.c.l.b16 %v106
  %v214 = vunpack.c.h.b16 %v106
  %v215 = vunpack.c.l.b16 %v107
  %v216 = vunpack.c.h.b16 %v107
  %v217 = vunpack.c.l.b16 %v108
  %v218 = vunpack.c.h.b16 %v108
  %v219 = vunpack.c.l.b16 %v109
  %v220 = vunpack.c.h.b16 %v109
  %v221 = vunpack.c.l.b16 %v110
  %v222 = vunpack.c.h.b16 %v110
  %v223 = vunpack.c.l.b16 %v111
  %v224 = vunpack.c.h.b16 %v111
  %v225 = vunpack.c.l.b16 %v112
  %v226 = vunpack.c.h.b16 %v112
  %v227 = vunpack.c.l.b16 %v113
  %v228 = vunpack.c.h.b16 %v113
  %v229 = vunpack.c.l.b16 %v114
  %v230 = vunpack.c.h.b16 %v114
  %v231 = vunpack.c.l.b16 %v115
  %v232 = vunpack.c.h.b16 %v115
  %v233 = vunpack.c.l.b16 %v116
  %v234 = vunpack.c.h.b16 %v116
  %v235 = vunpack.c.l.b16 %v117
  %v236 = vunpack.c.h.b16 %v117
  %v237 = vunpack.c.l.b16 %v118
  %v238 = vunpack.c.h.b16 %v118
  %v239 = vunpack.c.l.b16 %v119
  %v240 = vunpack.c.h.b16 %v119
  %v241 = vunpack.c.l.b16 %v120
  %v242 = vunpack.c.h.b16 %v120
  %v243 = vunpack.c.l.b16 %v121
  %v244 = vunpack.c.h.b16 %v121
  %v245 = vunpack.c.l.b16 %v122
  %v246 = vunpack.c.h.b16 %v122
  %v247 = vunpack.c.l.b16 %v123
  %v248 = vunpack.c.h.b16 %v123
  %v249 = vunpack.c.l.b16 %v124
  %v250 = vunpack.c.h.b16 %v124
  %v251 = vunpack.c.l.b16 %v125
  %v252 = vunpack.c.h.b16 %v125
  %v253 = vunpack.c.l.b16 %v126
  %v254 = vunpack.c.h.b16 %v126
  %v255 = vpack.c.b16 %v193, %v191
  %v256 = vpack.c.b16 %v194, %v192
  %v257 = vpack.c.b16 %v197, %v195
  %v258 = vpack.c.b16 %v198, %v196
  %v259 = vpack.c.b16 %v201, %v199
  %v260 = vpack.c.b16 %v202, %v200
  %v261 = vpack.c.b16 %v205, %v203
  %v262 = vpack.c.b16 %v206, %v204
  %v263 = vpack.c.b16 %v209, %v207
  %v264 = vpack.c.b16 %v210, %v208
  %v265 = vpack.c.b16 %v213, %v211
  %v266 = vpack.c.b16 %v214, %v212
  %v267 = vpack.c.b16 %v217, %v215
  %v268 = vpack.c.b16 %v218, %v216
  %v269 = vpack.c.b16 %v221, %v219
  %v270 = vpack.c.b16 %v222, %v220
  %v271 = vpack.c.b16 %v225, %v223
  %v272 = vpack.c.b16 %v226, %v224
  %v273 = vpack.c.b16 %v229, %v227
  %v274 = vpack.c.b16 %v230, %v228
  %v275 = vpack.c.b16 %v233, %v231
  %v276 = vpack.c.b16 %v234, %v232
  %v277 = vpack.c.b16 %v237, %v235
  %v278 = vpack.c.b16 %v238, %v236
  %v279 = vpack.c.b16 %v241, %v239
  %v280 = vpack.c.b16 %v242, %v240
  %v281 = vpack.c.b16 %v245, %v243
  %v282 = vpack.c.b16 %v246, %v244
  %v283 = vpack.c.b16 %v249, %v247
  %v284 = vpack.c.b16 %v250, %v248
  %v285 = vpack.c.b16 %v253, %v251
  %v286 = vpack.c.b16 %v254, %v252
  %v351 = vunpack.c.l.b16 %v127
  %v352 = vunpack.c.l.b16 %v128
  %v353 = vunpack.c.l.b16 %v129
  %v354 = vunpack.c.l.b16 %v130
  %v355 = vunpack.c.l.b16 %v131
  %v356 = vunpack.c.l.b16 %v132
  %v357 = vunpack.c.l.b16 %v133
  %v358 = vunpack.c.l.b16 %v134
  %v359 = vunpack.c.l.b16 %v135
  %v360 = vunpack.c.l.b16 %v136
  %v361 = vunpack.c.l.b16 %v137
  %v362 = vunpack.c.l.b16 %v138
  %v363 = vunpack.c.l.b16 %v139
  %v364 = vunpack.c.l.b16 %v140
  %v365 = vunpack.c.l.b16 %v141
  %v366 = vunpack.c.l.b16 %v142
  %v367 = vunpack.c.l.b16 %v143
  %v368 = vunpack.c.l.b16 %v144
  %v369 = vunpack.c.l.b16 %v145
  %v370 = vunpack.c.l.b16 %v146
  %v371 = vunpack.c.l.b16 %v147
  %v372 = vunpack.c.l.b16 %v148
  %v373 = vunpack.c.l.b16 %v149
  %v374 = vunpack.c.l.b16 %v150
  %v375 = vunpack.c.l.b16 %v151
  %v376 = vunpack.c.l.b16 %v152
  %v377 = vunpack.c.l.b16 %v153
  %v378 = vunpack.c.l.b16 %v154
  %v379 = vunpack.c.l.b16 %v155
  %v380 = vunpack.c.l.b16 %v156
  %v381 = vunpack.c.l.b16 %v157
  %v382 = vunpack.c.l.b16 %v158
  %v383 = vpack.c.b16 %v352, %v351
  %v384 = vpack.c.b16 %v354, %v353
  %v385 = vpack.c.b16 %v356, %v355
  %v386 = vpack.c.b16 %v358, %v357
  %v387 = vpack.c.b16 %v360, %v359
  %v388 = vpack.c.b16 %v362, %v361
  %v389 = vpack.c.b16 %v364, %v363
  %v390 = vpack.c.b16 %v366, %v365
  %v391 = vpack.c.b16 %v368, %v367
  %v392 = vpack.c.b16 %v370, %v369
  %v393 = vpack.c.b16 %v372, %v371
  %v394 = vpack.c.b16 %v374, %v373
  %v395 = vpack.c.b16 %v376, %v375
  %v396 = vpack.c.b16 %v378, %v377
  %v397 = vpack.c.b16 %v380, %v379
  %v398 = vpack.c.b16 %v382, %v381
  %415 = vmatprep.subr.bf16.mxu0 0
  %416 = vmatpush1.bf16.msra.mxu0 %v383
  %417 = vmatprep.subr.bf16.mxu0 0
  %418 = vmatpush1.bf16.msra.mxu0 %v384
  %419 = vmatprep.subr.bf16.mxu0 0
  %420 = vmatpush1.bf16.msra.mxu0 %v385
  %421 = vmatprep.subr.bf16.mxu0 0
  %422 = vmatpush1.bf16.msra.mxu0 %v386
  %423 = vmatprep.subr.bf16.mxu0 0
  %424 = vmatpush1.bf16.msra.mxu0 %v387
  %425 = vmatprep.subr.bf16.mxu0 0
  %426 = vmatpush1.bf16.msra.mxu0 %v388
  %427 = vmatprep.subr.bf16.mxu0 0
  %428 = vmatpush1.bf16.msra.mxu0 %v389
  %429 = vmatprep.subr.bf16.mxu0 0
  %430 = vmatpush1.bf16.msra.mxu0 %v390
  %431 = vmatprep.subr.bf16.mxu0 0
  %432 = vmatpush1.bf16.msra.mxu0 %v391
  %433 = vmatprep.subr.bf16.mxu0 0
  %434 = vmatpush1.bf16.msra.mxu0 %v392
  %435 = vmatprep.subr.bf16.mxu0 0
  %436 = vmatpush1.bf16.msra.mxu0 %v393
  %437 = vmatprep.subr.bf16.mxu0 0
  %438 = vmatpush1.bf16.msra.mxu0 %v394
  %439 = vmatprep.subr.bf16.mxu0 0
  %440 = vmatpush1.bf16.msra.mxu0 %v395
  %441 = vmatprep.subr.bf16.mxu0 0
  %442 = vmatpush1.bf16.msra.mxu0 %v396
  %443 = vmatprep.subr.bf16.mxu0 0
  %444 = vmatpush1.bf16.msra.mxu0 %v397
  %445 = vmatprep.subr.bf16.mxu0 0
  %446 = vmatpush1.bf16.msra.mxu0 %v398
  %447 = vmatprep.mubr.bf16.mxu0 %v256
  %448 = vmatmul.mubr.bf16.gmra.mrb[0].mxu0 %v255
  %v449 = vpop.f32.mrb[0].mxu0
  %v450 = vadd.f32 0.0, %v449
  %v451 = vpop.f32.mrb[0].mxu0
  %v452 = vpop.f32.mrb[0].mxu0
  %v453 = vadd.f32 0.0, %v452
  %v454 = vpop.f32.mrb[0].mxu0
  %455 = vmatprep.mubr.bf16.mxu0 %v258
  %456 = vmatmul.mubr.bf16.gmra.mrb[0].mxu0 %v257
  %v457 = vpop.f32.mrb[0].mxu0
  %v458 = vadd.f32 0.0, %v457
  %v459 = vpop.f32.mrb[0].mxu0
  %v460 = vpop.f32.mrb[0].mxu0
  %v461 = vadd.f32 0.0, %v460
  %v462 = vpop.f32.mrb[0].mxu0
  %463 = vmatprep.mubr.bf16.mxu0 %v260
  %464 = vmatmul.mubr.bf16.gmra.mrb[0].mxu0 %v259
  %v465 = vpop.f32.mrb[0].mxu0
  %v466 = vadd.f32 0.0, %v465
  %v467 = vpop.f32.mrb[0].mxu0
  %v468 = vpop.f32.mrb[0].mxu0
  %v469 = vadd.f32 0.0, %v468
  %v470 = vpop.f32.mrb[0].mxu0
  %471 = vmatprep.mubr.bf16.mxu0 %v262
  %472 = vmatmul.mubr.bf16.gmra.mrb[0].mxu0 %v261
  %v473 = vpop.f32.mrb[0].mxu0
  %v474 = vadd.f32 0.0, %v473
  %v475 = vpop.f32.mrb[0].mxu0
  %v476 = vpop.f32.mrb[0].mxu0
  %v477 = vadd.f32 0.0, %v476
  %v478 = vpop.f32.mrb[0].mxu0
  %479 = vmatprep.mubr.bf16.mxu0 %v264
  %480 = vmatmul.mubr.bf16.gmra.mrb[0].mxu0 %v263
  %v481 = vpop.f32.mrb[0].mxu0
  %v482 = vadd.f32 0.0, %v481
  %v483 = vpop.f32.mrb[0].mxu0
  %v484 = vpop.f32.mrb[0].mxu0
  %v485 = vadd.f32 0.0, %v484
  %v486 = vpop.f32.mrb[0].mxu0
  %487 = vmatprep.mubr.bf16.mxu0 %v266
  %488 = vmatmul.mubr.bf16.gmra.mrb[0].mxu0 %v265
  %v489 = vpop.f32.mrb[0].mxu0
  %v490 = vadd.f32 0.0, %v489
  %v491 = vpop.f32.mrb[0].mxu0
  %v492 = vpop.f32.mrb[0].mxu0
  %v493 = vadd.f32 0.0, %v492
  %v494 = vpop.f32.mrb[0].mxu0
  %495 = vmatprep.mubr.bf16.mxu0 %v268
  %496 = vmatmul.mubr.bf16.gmra.mrb[0].mxu0 %v267
  %v497 = vpop.f32.mrb[0].mxu0
  %v498 = vadd.f32 0.0, %v497
  %v499 = vpop.f32.mrb[0].mxu0
  %v500 = vpop.f32.mrb[0].mxu0
  %v501 = vadd.f32 0.0, %v500
  %v502 = vpop.f32.mrb[0].mxu0
  %503 = vmatprep.mubr.bf16.mxu0 %v270
  %504 = vmatmul.mubr.bf16.gmra.mrb[0].mxu0 %v269
  %v505 = vpop.f32.mrb[0].mxu0
  %v506 = vadd.f32 0.0, %v505
  %v507 = vpop.f32.mrb[0].mxu0
  %v508 = vpop.f32.mrb[0].mxu0
  %v509 = vadd.f32 0.0, %v508
  %v510 = vpop.f32.mrb[0].mxu0
  %511 = vmatprep.mubr.bf16.mxu0 %v272
  %512 = vmatmul.mubr.bf16.gmra.mrb[0].mxu0 %v271
  %v513 = vpop.f32.mrb[0].mxu0
  %v514 = vadd.f32 0.0, %v513
  %v515 = vpop.f32.mrb[0].mxu0
  %v516 = vpop.f32.mrb[0].mxu0
  %v517 = vadd.f32 0.0, %v516
  %v518 = vpop.f32.mrb[0].mxu0
  %519 = vmatprep.mubr.bf16.mxu0 %v274
  %520 = vmatmul.mubr.bf16.gmra.mrb[0].mxu0 %v273
  %v521 = vpop.f32.mrb[0].mxu0
  %v522 = vadd.f32 0.0, %v521
  %v523 = vpop.f32.mrb[0].mxu0
  %v524 = vpop.f32.mrb[0].mxu0
  %v525 = vadd.f32 0.0, %v524
  %v526 = vpop.f32.mrb[0].mxu0
  %527 = vmatprep.mubr.bf16.mxu0 %v276
  %528 = vmatmul.mubr.bf16.gmra.mrb[0].mxu0 %v275
  %v529 = vpop.f32.mrb[0].mxu0
  %v530 = vadd.f32 0.0, %v529
  %v531 = vpop.f32.mrb[0].mxu0
  %v532 = vpop.f32.mrb[0].mxu0
  %v533 = vadd.f32 0.0, %v532
  %v534 = vpop.f32.mrb[0].mxu0
  %535 = vmatprep.mubr.bf16.mxu0 %v278
  %536 = vmatmul.mubr.bf16.gmra.mrb[0].mxu0 %v277
  %v537 = vpop.f32.mrb[0].mxu0
  %v538 = vadd.f32 0.0, %v537
  %v539 = vpop.f32.mrb[0].mxu0
  %v540 = vpop.f32.mrb[0].mxu0
  %v541 = vadd.f32 0.0, %v540
  %v542 = vpop.f32.mrb[0].mxu0
  %543 = vmatprep.mubr.bf16.mxu0 %v280
  %544 = vmatmul.mubr.bf16.gmra.mrb[0].mxu0 %v279
  %v545 = vpop.f32.mrb[0].mxu0
  %v546 = vadd.f32 0.0, %v545
  %v547 = vpop.f32.mrb[0].mxu0
  %v548 = vpop.f32.mrb[0].mxu0
  %v549 = vadd.f32 0.0, %v548
  %v550 = vpop.f32.mrb[0].mxu0
  %551 = vmatprep.mubr.bf16.mxu0 %v282
  %552 = vmatmul.mubr.bf16.gmra.mrb[0].mxu0 %v281
  %v553 = vpop.f32.mrb[0].mxu0
  %v554 = vadd.f32 0.0, %v553
  %v555 = vpop.f32.mrb[0].mxu0
  %v556 = vpop.f32.mrb[0].mxu0
  %v557 = vadd.f32 0.0, %v556
  %v558 = vpop.f32.mrb[0].mxu0
  %559 = vmatprep.mubr.bf16.mxu0 %v284
  %560 = vmatmul.mubr.bf16.gmra.mrb[0].mxu0 %v283
  %v561 = vpop.f32.mrb[0].mxu0
  %v562 = vadd.f32 0.0, %v561
  %v563 = vpop.f32.mrb[0].mxu0
  %v564 = vpop.f32.mrb[0].mxu0
  %v565 = vadd.f32 0.0, %v564
  %v566 = vpop.f32.mrb[0].mxu0
  %567 = vmatprep.mubr.bf16.mxu0 %v286
  %568 = vmatmul.mubr.bf16.gmra.mrb[0].mxu0 %v285
  %v569 = vpop.f32.mrb[0].mxu0
  %v570 = vadd.f32 0.0, %v569
  %v571 = vpop.f32.mrb[0].mxu0
  %v572 = vpop.f32.mrb[0].mxu0
  %v573 = vadd.f32 0.0, %v572
  %v574 = vpop.f32.mrb[0].mxu0
  %575 = vdwg.mxu0
  %v576 = vadd.f32 %v63, %v450
  %v577 = vadd.f32 %v64, %v453
  %v578 = vadd.f32 %v65, %v458
  %v579 = vadd.f32 %v66, %v461
  %v580 = vadd.f32 %v67, %v466
  %v581 = vadd.f32 %v68, %v469
  %v582 = vadd.f32 %v69, %v474
  %v583 = vadd.f32 %v70, %v477
  %v584 = vadd.f32 %v71, %v482
  %v585 = vadd.f32 %v72, %v485
  %v586 = vadd.f32 %v73, %v490
  %v587 = vadd.f32 %v74, %v493
  %v588 = vadd.f32 %v75, %v498
  %v589 = vadd.f32 %v76, %v501
  %v590 = vadd.f32 %v77, %v506
  %v591 = vadd.f32 %v78, %v509
  %v592 = vadd.f32 %v79, %v514
  %v593 = vadd.f32 %v80, %v517
  %v594 = vadd.f32 %v81, %v522
  %v595 = vadd.f32 %v82, %v525
  %v596 = vadd.f32 %v83, %v530
  %v597 = vadd.f32 %v84, %v533
  %v598 = vadd.f32 %v85, %v538
  %v599 = vadd.f32 %v86, %v541
  %v600 = vadd.f32 %v87, %v546
  %v601 = vadd.f32 %v88, %v549
  %v602 = vadd.f32 %v89, %v554
  %v603 = vadd.f32 %v90, %v557
  %v604 = vadd.f32 %v91, %v562
  %v605 = vadd.f32 %v92, %v565
  %v606 = vadd.f32 %v93, %v570
  %v607 = vadd.f32 %v94, %v573
  %608 = vst [vmem:[#allocation2] sm:$0xff] %v576
  %609 = vst [vmem:[#allocation2 + $0x8] sm:$0xff] %v577
  %610 = vst [vmem:[#allocation2 + $0x10] sm:$0xff] %v578
  %611 = vst [vmem:[#allocation2 + $0x18] sm:$0xff] %v579
  %612 = vst [vmem:[#allocation2 + $0x20] sm:$0xff] %v580
  %613 = vst [vmem:[#allocation2 + $0x28] sm:$0xff] %v581
  %614 = vst [vmem:[#allocation2 + $0x30] sm:$0xff] %v582
  %615 = vst [vmem:[#allocation2 + $0x38] sm:$0xff] %v583
  %616 = vst [vmem:[#allocation2 + $0x40] sm:$0xff] %v584
  %617 = vst [vmem:[#allocation2 + $0x48] sm:$0xff] %v585
  %618 = vst [vmem:[#allocation2 + $0x50] sm:$0xff] %v586
  %619 = vst [vmem:[#allocation2 + $0x58] sm:$0xff] %v587
  %620 = vst [vmem:[#allocation2 + $0x60] sm:$0xff] %v588
  %621 = vst [vmem:[#allocation2 + $0x68] sm:$0xff] %v589
  %622 = vst [vmem:[#allocation2 + $0x70] sm:$0xff] %v590
  %623 = vst [vmem:[#allocation2 + $0x78] sm:$0xff] %v591
  %624 = vst [vmem:[#allocation2 + $0x80] sm:$0xff] %v592
  %625 = vst [vmem:[#allocation2 + $0x88] sm:$0xff] %v593
  %626 = vst [vmem:[#allocation2 + $0x90] sm:$0xff] %v594
  %627 = vst [vmem:[#allocation2 + $0x98] sm:$0xff] %v595
  %628 = vst [vmem:[#allocation2 + $0xa0] sm:$0xff] %v596
  %629 = vst [vmem:[#allocation2 + $0xa8] sm:$0xff] %v597
  %630 = vst [vmem:[#allocation2 + $0xb0] sm:$0xff] %v598
  %631 = vst [vmem:[#allocation2 + $0xb8] sm:$0xff] %v599
  %632 = vst [vmem:[#allocation2 + $0xc0] sm:$0xff] %v600
  %633 = vst [vmem:[#allocation2 + $0xc8] sm:$0xff] %v601
  %634 = vst [vmem:[#allocation2 + $0xd0] sm:$0xff] %v602
  %635 = vst [vmem:[#allocation2 + $0xd8] sm:$0xff] %v603
  %636 = vst [vmem:[#allocation2 + $0xe0] sm:$0xff] %v604
  %637 = vst [vmem:[#allocation2 + $0xe8] sm:$0xff] %v605
  %638 = vst [vmem:[#allocation2 + $0xf0] sm:$0xff] %v606
  %639 = vst [vmem:[#allocation2 + $0xf8] sm:$0xff] %v607
  // Predicated region
  $region34: #{ngcf_forward.3} parent=0 // pred_check
    %p640 = pneg %p27
  $region35: #{ngcf_forward.3} parent=0 // pred_check_branch
    %642 = sbr.rel (%p640) target = $region37
  $region36: #{ngcf_forward.3} parent=0 // pred_region
    %v643 = vld [vmem:[#allocation2] sm:$0xff]
    %v644 = vld [vmem:[#allocation2 + $0x8] sm:$0xff]
    %v645 = vld [vmem:[#allocation2 + $0x10] sm:$0xff]
    %v646 = vld [vmem:[#allocation2 + $0x18] sm:$0xff]
    %v647 = vld [vmem:[#allocation2 + $0x20] sm:$0xff]
    %v648 = vld [vmem:[#allocation2 + $0x28] sm:$0xff]
    %v649 = vld [vmem:[#allocation2 + $0x30] sm:$0xff]
    %v650 = vld [vmem:[#allocation2 + $0x38] sm:$0xff]
    %v651 = vld [vmem:[#allocation2 + $0x40] sm:$0xff]
    %v652 = vld [vmem:[#allocation2 + $0x48] sm:$0xff]
    %v653 = vld [vmem:[#allocation2 + $0x50] sm:$0xff]
    %v654 = vld [vmem:[#allocation2 + $0x58] sm:$0xff]
    %v655 = vld [vmem:[#allocation2 + $0x60] sm:$0xff]
    %v656 = vld [vmem:[#allocation2 + $0x68] sm:$0xff]
    %v657 = vld [vmem:[#allocation2 + $0x70] sm:$0xff]
    %v658 = vld [vmem:[#allocation2 + $0x78] sm:$0xff]
    %v659 = vld [vmem:[#allocation2 + $0x80] sm:$0xff]
    %v660 = vld [vmem:[#allocation2 + $0x88] sm:$0xff]
    %v661 = vld [vmem:[#allocation2 + $0x90] sm:$0xff]
    %v662 = vld [vmem:[#allocation2 + $0x98] sm:$0xff]
    %v663 = vld [vmem:[#allocation2 + $0xa0] sm:$0xff]
    %v664 = vld [vmem:[#allocation2 + $0xa8] sm:$0xff]
    %v665 = vld [vmem:[#allocation2 + $0xb0] sm:$0xff]
    %v666 = vld [vmem:[#allocation2 + $0xb8] sm:$0xff]
    %v667 = vld [vmem:[#allocation2 + $0xc0] sm:$0xff]
    %v668 = vld [vmem:[#allocation2 + $0xc8] sm:$0xff]
    %v669 = vld [vmem:[#allocation2 + $0xd0] sm:$0xff]
    %v670 = vld [vmem:[#allocation2 + $0xd8] sm:$0xff]
    %v671 = vld [vmem:[#allocation2 + $0xe0] sm:$0xff]
    %v672 = vld [vmem:[#allocation2 + $0xe8] sm:$0xff]
    %v673 = vld [vmem:[#allocation2 + $0xf0] sm:$0xff]
    %v674 = vld [vmem:[#allocation2 + $0xf8] sm:$0xff]
    %v675 = vld [vmem:[%s2] sm:$0xf]
    %v676 = vld [vmem:[%s2 + $0x4] sm:$0xf]
    %v677 = vld [vmem:[%s2 + $0x8] sm:$0xf]
    %v678 = vld [vmem:[%s2 + $0xc] sm:$0xf]
    %v679 = vld [vmem:[%s2 + $0x10] sm:$0xf]
    %v680 = vld [vmem:[%s2 + $0x14] sm:$0xf]
    %v681 = vld [vmem:[%s2 + $0x18] sm:$0xf]
    %v682 = vld [vmem:[%s2 + $0x1c] sm:$0xf]
    %v683 = vld [vmem:[%s2 + $0x20] sm:$0xf]
    %v684 = vld [vmem:[%s2 + $0x24] sm:$0xf]
    %v685 = vld [vmem:[%s2 + $0x28] sm:$0xf]
    %v686 = vld [vmem:[%s2 + $0x2c] sm:$0xf]
    %v687 = vld [vmem:[%s2 + $0x30] sm:$0xf]
    %v688 = vld [vmem:[%s2 + $0x34] sm:$0xf]
    %v689 = vld [vmem:[%s2 + $0x38] sm:$0xf]
    %v690 = vld [vmem:[%s2 + $0x3c] sm:$0xf]
    %v691 = vld [vmem:[%s2 + $0x40] sm:$0xf]
    %v692 = vld [vmem:[%s2 + $0x44] sm:$0xf]
    %v693 = vld [vmem:[%s2 + $0x48] sm:$0xf]
    %v694 = vld [vmem:[%s2 + $0x4c] sm:$0xf]
    %v695 = vld [vmem:[%s2 + $0x50] sm:$0xf]
    %v696 = vld [vmem:[%s2 + $0x54] sm:$0xf]
    %v697 = vld [vmem:[%s2 + $0x58] sm:$0xf]
    %v698 = vld [vmem:[%s2 + $0x5c] sm:$0xf]
    %v699 = vld [vmem:[%s2 + $0x60] sm:$0xf]
    %v700 = vld [vmem:[%s2 + $0x64] sm:$0xf]
    %v701 = vld [vmem:[%s2 + $0x68] sm:$0xf]
    %v702 = vld [vmem:[%s2 + $0x6c] sm:$0xf]
    %v703 = vld [vmem:[%s2 + $0x70] sm:$0xf]
    %v704 = vld [vmem:[%s2 + $0x74] sm:$0xf]
    %v705 = vld [vmem:[%s2 + $0x78] sm:$0xf]
    %v706 = vld [vmem:[%s2 + $0x7c] sm:$0xf]
    %v707 = vunpack.c.l.bf16 %v675
    %v708 = vunpack.c.l.bf16 %v676
    %v709 = vunpack.c.l.bf16 %v677
    %v710 = vunpack.c.l.bf16 %v678
    %v711 = vunpack.c.l.bf16 %v679
    %v712 = vunpack.c.l.bf16 %v680
    %v713 = vunpack.c.l.bf16 %v681
    %v714 = vunpack.c.l.bf16 %v682
    %v715 = vunpack.c.l.bf16 %v683
    %v716 = vunpack.c.l.bf16 %v684
    %v717 = vunpack.c.l.bf16 %v685
    %v718 = vunpack.c.l.bf16 %v686
    %v719 = vunpack.c.l.bf16 %v687
    %v720 = vunpack.c.l.bf16 %v688
    %v721 = vunpack.c.l.bf16 %v689
    %v722 = vunpack.c.l.bf16 %v690
    %v723 = vunpack.c.l.bf16 %v691
    %v724 = vunpack.c.l.bf16 %v692
    %v725 = vunpack.c.l.bf16 %v693
    %v726 = vunpack.c.l.bf16 %v694
    %v727 = vunpack.c.l.bf16 %v695
    %v728 = vunpack.c.l.bf16 %v696
    %v729 = vunpack.c.l.bf16 %v697
    %v730 = vunpack.c.l.bf16 %v698
    %v731 = vunpack.c.l.bf16 %v699
    %v732 = vunpack.c.l.bf16 %v700
    %v733 = vunpack.c.l.bf16 %v701
    %v734 = vunpack.c.l.bf16 %v702
    %v735 = vunpack.c.l.bf16 %v703
    %v736 = vunpack.c.l.bf16 %v704
    %v737 = vunpack.c.l.bf16 %v705
    %v738 = vunpack.c.l.bf16 %v706
    %v739 = vadd.f32 %v643, %v707
    %v740 = vadd.f32 %v644, %v708
    %v741 = vadd.f32 %v645, %v709
    %v742 = vadd.f32 %v646, %v710
    %v743 = vadd.f32 %v647, %v711
    %v744 = vadd.f32 %v648, %v712
    %v745 = vadd.f32 %v649, %v713
    %v746 = vadd.f32 %v650, %v714
    %v747 = vadd.f32 %v651, %v715
    %v748 = vadd.f32 %v652, %v716
    %v749 = vadd.f32 %v653, %v717
    %v750 = vadd.f32 %v654, %v718
    %v751 = vadd.f32 %v655, %v719
    %v752 = vadd.f32 %v656, %v720
    %v753 = vadd.f32 %v657, %v721
    %v754 = vadd.f32 %v658, %v722
    %v755 = vadd.f32 %v659, %v723
    %v756 = vadd.f32 %v660, %v724
    %v757 = vadd.f32 %v661, %v725
    %v758 = vadd.f32 %v662, %v726
    %v759 = vadd.f32 %v663, %v727
    %v760 = vadd.f32 %v664, %v728
    %v761 = vadd.f32 %v665, %v729
    %v762 = vadd.f32 %v666, %v730
    %v763 = vadd.f32 %v667, %v731
    %v764 = vadd.f32 %v668, %v732
    %v765 = vadd.f32 %v669, %v733
    %v766 = vadd.f32 %v670, %v734
    %v767 = vadd.f32 %v671, %v735
    %v768 = vadd.f32 %v672, %v736
    %v769 = vadd.f32 %v673, %v737
    %v770 = vadd.f32 %v674, %v738
    %v771 = vpack.c.bf16 %v740, %v739
    %v772 = vpack.c.bf16 %v742, %v741
    %v773 = vpack.c.bf16 %v744, %v743
    %v774 = vpack.c.bf16 %v746, %v745
    %v775 = vpack.c.bf16 %v748, %v747
    %v776 = vpack.c.bf16 %v750, %v749
    %v777 = vpack.c.bf16 %v752, %v751
    %v778 = vpack.c.bf16 %v754, %v753
    %v779 = vpack.c.bf16 %v756, %v755
    %v780 = vpack.c.bf16 %v758, %v757
    %v781 = vpack.c.bf16 %v760, %v759
    %v782 = vpack.c.bf16 %v762, %v761
    %v783 = vpack.c.bf16 %v764, %v763
    %v784 = vpack.c.bf16 %v766, %v765
    %v785 = vpack.c.bf16 %v768, %v767
    %v786 = vpack.c.bf16 %v770, %v769
    %v787 = vld [vmem:[%s3] sm:$0xf]
    %v788 = vld [vmem:[%s3 + $0x4] sm:$0xf]
    %v789 = vld [vmem:[%s3 + $0x8] sm:$0xf]
    %v790 = vld [vmem:[%s3 + $0xc] sm:$0xf]
    %v791 = vld [vmem:[%s3 + $0x10] sm:$0xf]
    %v792 = vld [vmem:[%s3 + $0x14] sm:$0xf]
    %v793 = vld [vmem:[%s3 + $0x18] sm:$0xf]
    %v794 = vld [vmem:[%s3 + $0x1c] sm:$0xf]
    %v795 = vld [vmem:[%s3 + $0x20] sm:$0xf]
    %v796 = vld [vmem:[%s3 + $0x24] sm:$0xf]
    %v797 = vld [vmem:[%s3 + $0x28] sm:$0xf]
    %v798 = vld [vmem:[%s3 + $0x2c] sm:$0xf]
    %v799 = vld [vmem:[%s3 + $0x30] sm:$0xf]
    %v800 = vld [vmem:[%s3 + $0x34] sm:$0xf]
    %v801 = vld [vmem:[%s3 + $0x38] sm:$0xf]
    %v802 = vld [vmem:[%s3 + $0x3c] sm:$0xf]
    %v803 = vld [vmem:[%s4] sm:$0x1]
    %v805 = vlaneseq
    %v806 = vshrl.u32 %v805, 7
    %v807 = vsub.s32 0, %v806
    %v808 = vrot.slane %v803, %v807
    %v826 = vunpack.c.l.b16 %v787
    %v827 = vunpack.c.l.b16 %v788
    %v828 = vunpack.c.l.b16 %v789
    %v829 = vunpack.c.l.b16 %v790
    %v830 = vunpack.c.l.b16 %v791
    %v831 = vunpack.c.l.b16 %v792
    %v832 = vunpack.c.l.b16 %v793
    %v833 = vunpack.c.l.b16 %v794
    %v834 = vunpack.c.l.b16 %v795
    %v835 = vunpack.c.l.b16 %v796
    %v836 = vunpack.c.l.b16 %v797
    %v837 = vunpack.c.l.b16 %v798
    %v838 = vunpack.c.l.b16 %v799
    %v839 = vunpack.c.l.b16 %v800
    %v840 = vunpack.c.l.b16 %v801
    %v841 = vunpack.c.l.b16 %v802
    %v842 = vpack.c.b16 %v827, %v826
    %v843 = vpack.c.b16 %v829, %v828
    %v844 = vpack.c.b16 %v831, %v830
    %v845 = vpack.c.b16 %v833, %v832
    %v846 = vpack.c.b16 %v835, %v834
    %v847 = vpack.c.b16 %v837, %v836
    %v848 = vpack.c.b16 %v839, %v838
    %v849 = vpack.c.b16 %v841, %v840
    %858 = vmatprep.subr.bf16.mxu0 0
    %859 = vmatpush1.bf16.msra.mxu0 %v842
    %860 = vmatprep.subr.bf16.mxu0 0
    %861 = vmatpush1.bf16.msra.mxu0 %v843
    %862 = vmatprep.subr.bf16.mxu0 0
    %863 = vmatpush1.bf16.msra.mxu0 %v844
    %864 = vmatprep.subr.bf16.mxu0 0
    %865 = vmatpush1.bf16.msra.mxu0 %v845
    %866 = vmatprep.subr.bf16.mxu0 0
    %867 = vmatpush1.bf16.msra.mxu0 %v846
    %868 = vmatprep.subr.bf16.mxu0 0
    %869 = vmatpush1.bf16.msra.mxu0 %v847
    %870 = vmatprep.subr.bf16.mxu0 0
    %871 = vmatpush1.bf16.msra.mxu0 %v848
    %872 = vmatprep.subr.bf16.mxu0 0
    %873 = vmatpush1.bf16.msra.mxu0 %v849
    %874 = vmatprep.subr.bf16.mxu0 0
    %875 = vmatpush1.bf16.msra.mxu0 0
    %876 = vmatprep.subr.bf16.mxu0 0
    %877 = vmatpush1.bf16.msra.mxu0 0
    %878 = vmatprep.subr.bf16.mxu0 0
    %879 = vmatpush1.bf16.msra.mxu0 0
    %880 = vmatprep.subr.bf16.mxu0 0
    %881 = vmatpush1.bf16.msra.mxu0 0
    %882 = vmatprep.subr.bf16.mxu0 0
    %883 = vmatpush1.bf16.msra.mxu0 0
    %884 = vmatprep.subr.bf16.mxu0 0
    %885 = vmatpush1.bf16.msra.mxu0 0
    %886 = vmatprep.subr.bf16.mxu0 0
    %887 = vmatpush1.bf16.msra.mxu0 0
    %888 = vmatprep.subr.bf16.mxu0 0
    %889 = vmatpush1.bf16.msra.mxu0 0
    %890 = vmatprep.mubr.bf16.mxu0 0
    %891 = vmatmul.mubr.bf16.gmra.mrb[0].mxu0 %v771
    %v892 = vpop.f32.mrb[0].mxu0
    %v893 = vadd.f32 %v808, %v892
    %v894 = vpop.f32.mrb[0].mxu0
    %v895 = vpop.f32.mrb[0].mxu0
    %v896 = vadd.f32 %v808, %v895
    %v897 = vpop.f32.mrb[0].mxu0
    %898 = vmatprep.mubr.bf16.mxu0 0
    %899 = vmatmul.mubr.bf16.gmra.mrb[0].mxu0 %v772
    %v900 = vpop.f32.mrb[0].mxu0
    %v901 = vadd.f32 %v808, %v900
    %v902 = vpop.f32.mrb[0].mxu0
    %v903 = vpop.f32.mrb[0].mxu0
    %v904 = vadd.f32 %v808, %v903
    %v905 = vpop.f32.mrb[0].mxu0
    %906 = vmatprep.mubr.bf16.mxu0 0
    %907 = vmatmul.mubr.bf16.gmra.mrb[0].mxu0 %v773
    %v908 = vpop.f32.mrb[0].mxu0
    %v909 = vadd.f32 %v808, %v908
    %v910 = vpop.f32.mrb[0].mxu0
    %v911 = vpop.f32.mrb[0].mxu0
    %v912 = vadd.f32 %v808, %v911
    %v913 = vpop.f32.mrb[0].mxu0
    %914 = vmatprep.mubr.bf16.mxu0 0
    %915 = vmatmul.mubr.bf16.gmra.mrb[0].mxu0 %v774
    %v916 = vpop.f32.mrb[0].mxu0
    %v917 = vadd.f32 %v808, %v916
    %v918 = vpop.f32.mrb[0].mxu0
    %v919 = vpop.f32.mrb[0].mxu0
    %v920 = vadd.f32 %v808, %v919
    %v921 = vpop.f32.mrb[0].mxu0
    %922 = vmatprep.mubr.bf16.mxu0 0
    %923 = vmatmul.mubr.bf16.gmra.mrb[0].mxu0 %v775
    %v924 = vpop.f32.mrb[0].mxu0
    %v925 = vadd.f32 %v808, %v924
    %v926 = vpop.f32.mrb[0].mxu0
    %v927 = vpop.f32.mrb[0].mxu0
    %v928 = vadd.f32 %v808, %v927
    %v929 = vpop.f32.mrb[0].mxu0
    %930 = vmatprep.mubr.bf16.mxu0 0
    %931 = vmatmul.mubr.bf16.gmra.mrb[0].mxu0 %v776
    %v932 = vpop.f32.mrb[0].mxu0
    %v933 = vadd.f32 %v808, %v932
    %v934 = vpop.f32.mrb[0].mxu0
    %v935 = vpop.f32.mrb[0].mxu0
    %v936 = vadd.f32 %v808, %v935
    %v937 = vpop.f32.mrb[0].mxu0
    %938 = vmatprep.mubr.bf16.mxu0 0
    %939 = vmatmul.mubr.bf16.gmra.mrb[0].mxu0 %v777
    %v940 = vpop.f32.mrb[0].mxu0
    %v941 = vadd.f32 %v808, %v940
    %v942 = vpop.f32.mrb[0].mxu0
    %v943 = vpop.f32.mrb[0].mxu0
    %v944 = vadd.f32 %v808, %v943
    %v945 = vpop.f32.mrb[0].mxu0
    %946 = vmatprep.mubr.bf16.mxu0 0
    %947 = vmatmul.mubr.bf16.gmra.mrb[0].mxu0 %v778
    %v948 = vpop.f32.mrb[0].mxu0
    %v949 = vadd.f32 %v808, %v948
    %v950 = vpop.f32.mrb[0].mxu0
    %v951 = vpop.f32.mrb[0].mxu0
    %v952 = vadd.f32 %v808, %v951
    %v953 = vpop.f32.mrb[0].mxu0
    %954 = vmatprep.mubr.bf16.mxu0 0
    %955 = vmatmul.mubr.bf16.gmra.mrb[0].mxu0 %v779
    %v956 = vpop.f32.mrb[0].mxu0
    %v957 = vadd.f32 %v808, %v956
    %v958 = vpop.f32.mrb[0].mxu0
    %v959 = vpop.f32.mrb[0].mxu0
    %v960 = vadd.f32 %v808, %v959
    %v961 = vpop.f32.mrb[0].mxu0
    %962 = vmatprep.mubr.bf16.mxu0 0
    %963 = vmatmul.mubr.bf16.gmra.mrb[0].mxu0 %v780
    %v964 = vpop.f32.mrb[0].mxu0
    %v965 = vadd.f32 %v808, %v964
    %v966 = vpop.f32.mrb[0].mxu0
    %v967 = vpop.f32.mrb[0].mxu0
    %v968 = vadd.f32 %v808, %v967
    %v969 = vpop.f32.mrb[0].mxu0
    %970 = vmatprep.mubr.bf16.mxu0 0
    %971 = vmatmul.mubr.bf16.gmra.mrb[0].mxu0 %v781
    %v972 = vpop.f32.mrb[0].mxu0
    %v973 = vadd.f32 %v808, %v972
    %v974 = vpop.f32.mrb[0].mxu0
    %v975 = vpop.f32.mrb[0].mxu0
    %v976 = vadd.f32 %v808, %v975
    %v977 = vpop.f32.mrb[0].mxu0
    %978 = vmatprep.mubr.bf16.mxu0 0
    %979 = vmatmul.mubr.bf16.gmra.mrb[0].mxu0 %v782
    %v980 = vpop.f32.mrb[0].mxu0
    %v981 = vadd.f32 %v808, %v980
    %v982 = vpop.f32.mrb[0].mxu0
    %v983 = vpop.f32.mrb[0].mxu0
    %v984 = vadd.f32 %v808, %v983
    %v985 = vpop.f32.mrb[0].mxu0
    %986 = vmatprep.mubr.bf16.mxu0 0
    %987 = vmatmul.mubr.bf16.gmra.mrb[0].mxu0 %v783
    %v988 = vpop.f32.mrb[0].mxu0
    %v989 = vadd.f32 %v808, %v988
    %v990 = vpop.f32.mrb[0].mxu0
    %v991 = vpop.f32.mrb[0].mxu0
    %v992 = vadd.f32 %v808, %v991
    %v993 = vpop.f32.mrb[0].mxu0
    %994 = vmatprep.mubr.bf16.mxu0 0
    %995 = vmatmul.mubr.bf16.gmra.mrb[0].mxu0 %v784
    %v996 = vpop.f32.mrb[0].mxu0
    %v997 = vadd.f32 %v808, %v996
    %v998 = vpop.f32.mrb[0].mxu0
    %v999 = vpop.f32.mrb[0].mxu0
    %v1000 = vadd.f32 %v808, %v999
    %v1001 = vpop.f32.mrb[0].mxu0
    %1002 = vmatprep.mubr.bf16.mxu0 0
    %1003 = vmatmul.mubr.bf16.gmra.mrb[0].mxu0 %v785
    %v1004 = vpop.f32.mrb[0].mxu0
    %v1005 = vadd.f32 %v808, %v1004
    %v1006 = vpop.f32.mrb[0].mxu0
    %v1007 = vpop.f32.mrb[0].mxu0
    %v1008 = vadd.f32 %v808, %v1007
    %v1009 = vpop.f32.mrb[0].mxu0
    %1010 = vmatprep.mubr.bf16.mxu0 0
    %1011 = vmatmul.mubr.bf16.gmra.mrb[0].mxu0 %v786
    %v1012 = vpop.f32.mrb[0].mxu0
    %v1013 = vadd.f32 %v808, %v1012
    %v1014 = vpop.f32.mrb[0].mxu0
    %v1015 = vpop.f32.mrb[0].mxu0
    %v1016 = vadd.f32 %v808, %v1015
    %v1017 = vpop.f32.mrb[0].mxu0
    %1018 = vdwg.mxu0
    %v1019 = vld [vmem:[%s5] sm:$0xf]
    %v1020 = vld [vmem:[%s5 + $0x4] sm:$0xf]
    %v1021 = vld [vmem:[%s5 + $0x8] sm:$0xf]
    %v1022 = vld [vmem:[%s5 + $0xc] sm:$0xf]
    %v1023 = vld [vmem:[%s5 + $0x10] sm:$0xf]
    %v1024 = vld [vmem:[%s5 + $0x14] sm:$0xf]
    %v1025 = vld [vmem:[%s5 + $0x18] sm:$0xf]
    %v1026 = vld [vmem:[%s5 + $0x1c] sm:$0xf]
    %v1027 = vld [vmem:[%s5 + $0x20] sm:$0xf]
    %v1028 = vld [vmem:[%s5 + $0x24] sm:$0xf]
    %v1029 = vld [vmem:[%s5 + $0x28] sm:$0xf]
    %v1030 = vld [vmem:[%s5 + $0x2c] sm:$0xf]
    %v1031 = vld [vmem:[%s5 + $0x30] sm:$0xf]
    %v1032 = vld [vmem:[%s5 + $0x34] sm:$0xf]
    %v1033 = vld [vmem:[%s5 + $0x38] sm:$0xf]
    %v1034 = vld [vmem:[%s5 + $0x3c] sm:$0xf]
    %v1035 = vld [vmem:[%s6] sm:$0x1]
    %v1037 = vlaneseq
    %v1038 = vshrl.u32 %v1037, 7
    %v1039 = vsub.s32 0, %v1038
    %v1040 = vrot.slane %v1035, %v1039
    %v1074 = vunpack.c.l.b16 %v675
    %v1075 = vunpack.c.l.b16 %v676
    %v1076 = vunpack.c.l.b16 %v677
    %v1077 = vunpack.c.l.b16 %v678
    %v1078 = vunpack.c.l.b16 %v679
    %v1079 = vunpack.c.l.b16 %v680
    %v1080 = vunpack.c.l.b16 %v681
    %v1081 = vunpack.c.l.b16 %v682
    %v1082 = vunpack.c.l.b16 %v683
    %v1083 = vunpack.c.l.b16 %v684
    %v1084 = vunpack.c.l.b16 %v685
    %v1085 = vunpack.c.l.b16 %v686
    %v1086 = vunpack.c.l.b16 %v687
    %v1087 = vunpack.c.l.b16 %v688
    %v1088 = vunpack.c.l.b16 %v689
    %v1089 = vunpack.c.l.b16 %v690
    %v1090 = vunpack.c.l.b16 %v691
    %v1091 = vunpack.c.l.b16 %v692
    %v1092 = vunpack.c.l.b16 %v693
    %v1093 = vunpack.c.l.b16 %v694
    %v1094 = vunpack.c.l.b16 %v695
    %v1095 = vunpack.c.l.b16 %v696
    %v1096 = vunpack.c.l.b16 %v697
    %v1097 = vunpack.c.l.b16 %v698
    %v1098 = vunpack.c.l.b16 %v699
    %v1099 = vunpack.c.l.b16 %v700
    %v1100 = vunpack.c.l.b16 %v701
    %v1101 = vunpack.c.l.b16 %v702
    %v1102 = vunpack.c.l.b16 %v703
    %v1103 = vunpack.c.l.b16 %v704
    %v1104 = vunpack.c.l.b16 %v705
    %v1105 = vunpack.c.l.b16 %v706
    %v1106 = vpack.c.b16 %v1075, %v1074
    %v1107 = vpack.c.b16 %v1077, %v1076
    %v1108 = vpack.c.b16 %v1079, %v1078
    %v1109 = vpack.c.b16 %v1081, %v1080
    %v1110 = vpack.c.b16 %v1083, %v1082
    %v1111 = vpack.c.b16 %v1085, %v1084
    %v1112 = vpack.c.b16 %v1087, %v1086
    %v1113 = vpack.c.b16 %v1089, %v1088
    %v1114 = vpack.c.b16 %v1091, %v1090
    %v1115 = vpack.c.b16 %v1093, %v1092
    %v1116 = vpack.c.b16 %v1095, %v1094
    %v1117 = vpack.c.b16 %v1097, %v1096
    %v1118 = vpack.c.b16 %v1099, %v1098
    %v1119 = vpack.c.b16 %v1101, %v1100
    %v1120 = vpack.c.b16 %v1103, %v1102
    %v1121 = vpack.c.b16 %v1105, %v1104
    %v1154 = vunpack.c.l.b16 %v1019
    %v1155 = vunpack.c.l.b16 %v1020
    %v1156 = vunpack.c.l.b16 %v1021
    %v1157 = vunpack.c.l.b16 %v1022
    %v1158 = vunpack.c.l.b16 %v1023
    %v1159 = vunpack.c.l.b16 %v1024
    %v1160 = vunpack.c.l.b16 %v1025
    %v1161 = vunpack.c.l.b16 %v1026
    %v1162 = vunpack.c.l.b16 %v1027
    %v1163 = vunpack.c.l.b16 %v1028
    %v1164 = vunpack.c.l.b16 %v1029
    %v1165 = vunpack.c.l.b16 %v1030
    %v1166 = vunpack.c.l.b16 %v1031
    %v1167 = vunpack.c.l.b16 %v1032
    %v1168 = vunpack.c.l.b16 %v1033
    %v1169 = vunpack.c.l.b16 %v1034
    %v1170 = vpack.c.b16 %v1155, %v1154
    %v1171 = vpack.c.b16 %v1157, %v1156
    %v1172 = vpack.c.b16 %v1159, %v1158
    %v1173 = vpack.c.b16 %v1161, %v1160
    %v1174 = vpack.c.b16 %v1163, %v1162
    %v1175 = vpack.c.b16 %v1165, %v1164
    %v1176 = vpack.c.b16 %v1167, %v1166
    %v1177 = vpack.c.b16 %v1169, %v1168
    %1186 = vmatprep.subr.bf16.mxu0 0
    %1187 = vmatpush1.bf16.msra.mxu0 %v1170
    %1188 = vmatprep.subr.bf16.mxu0 0
    %1189 = vmatpush1.bf16.msra.mxu0 %v1171
    %1190 = vmatprep.subr.bf16.mxu0 0
    %1191 = vmatpush1.bf16.msra.mxu0 %v1172
    %1192 = vmatprep.subr.bf16.mxu0 0
    %1193 = vmatpush1.bf16.msra.mxu0 %v1173
    %1194 = vmatprep.subr.bf16.mxu0 0
    %1195 = vmatpush1.bf16.msra.mxu0 %v1174
    %1196 = vmatprep.subr.bf16.mxu0 0
    %1197 = vmatpush1.bf16.msra.mxu0 %v1175
    %1198 = vmatprep.subr.bf16.mxu0 0
    %1199 = vmatpush1.bf16.msra.mxu0 %v1176
    %1200 = vmatprep.subr.bf16.mxu0 0
    %1201 = vmatpush1.bf16.msra.mxu0 %v1177
    %1202 = vmatprep.subr.bf16.mxu0 0
    %1203 = vmatpush1.bf16.msra.mxu0 0
    %1204 = vmatprep.subr.bf16.mxu0 0
    %1205 = vmatpush1.bf16.msra.mxu0 0
    %1206 = vmatprep.subr.bf16.mxu0 0
    %1207 = vmatpush1.bf16.msra.mxu0 0
    %1208 = vmatprep.subr.bf16.mxu0 0
    %1209 = vmatpush1.bf16.msra.mxu0 0
    %1210 = vmatprep.subr.bf16.mxu0 0
    %1211 = vmatpush1.bf16.msra.mxu0 0
    %1212 = vmatprep.subr.bf16.mxu0 0
    %1213 = vmatpush1.bf16.msra.mxu0 0
    %1214 = vmatprep.subr.bf16.mxu0 0
    %1215 = vmatpush1.bf16.msra.mxu0 0
    %1216 = vmatprep.subr.bf16.mxu0 0
    %1217 = vmatpush1.bf16.msra.mxu0 0
    %1218 = vmatprep.mubr.bf16.mxu0 0
    %1219 = vmatmul.mubr.bf16.gmra.mrb[0].mxu0 %v1106
    %v1220 = vpop.f32.mrb[0].mxu0
    %v1221 = vadd.f32 %v1040, %v1220
    %v1222 = vpop.f32.mrb[0].mxu0
    %v1223 = vpop.f32.mrb[0].mxu0
    %v1224 = vadd.f32 %v1040, %v1223
    %v1225 = vpop.f32.mrb[0].mxu0
    %1226 = vmatprep.mubr.bf16.mxu0 0
    %1227 = vmatmul.mubr.bf16.gmra.mrb[0].mxu0 %v1107
    %v1228 = vpop.f32.mrb[0].mxu0
    %v1229 = vadd.f32 %v1040, %v1228
    %v1230 = vpop.f32.mrb[0].mxu0
    %v1231 = vpop.f32.mrb[0].mxu0
    %v1232 = vadd.f32 %v1040, %v1231
    %v1233 = vpop.f32.mrb[0].mxu0
    %1234 = vmatprep.mubr.bf16.mxu0 0
    %1235 = vmatmul.mubr.bf16.gmra.mrb[0].mxu0 %v1108
    %v1236 = vpop.f32.mrb[0].mxu0
    %v1237 = vadd.f32 %v1040, %v1236
    %v1238 = vpop.f32.mrb[0].mxu0
    %v1239 = vpop.f32.mrb[0].mxu0
    %v1240 = vadd.f32 %v1040, %v1239
    %v1241 = vpop.f32.mrb[0].mxu0
    %1242 = vmatprep.mubr.bf16.mxu0 0
    %1243 = vmatmul.mubr.bf16.gmra.mrb[0].mxu0 %v1109
    %v1244 = vpop.f32.mrb[0].mxu0
    %v1245 = vadd.f32 %v1040, %v1244
    %v1246 = vpop.f32.mrb[0].mxu0
    %v1247 = vpop.f32.mrb[0].mxu0
    %v1248 = vadd.f32 %v1040, %v1247
    %v1249 = vpop.f32.mrb[0].mxu0
    %1250 = vmatprep.mubr.bf16.mxu0 0
    %1251 = vmatmul.mubr.bf16.gmra.mrb[0].mxu0 %v1110
    %v1252 = vpop.f32.mrb[0].mxu0
    %v1253 = vadd.f32 %v1040, %v1252
    %v1254 = vpop.f32.mrb[0].mxu0
    %v1255 = vpop.f32.mrb[0].mxu0
    %v1256 = vadd.f32 %v1040, %v1255
    %v1257 = vpop.f32.mrb[0].mxu0
    %1258 = vmatprep.mubr.bf16.mxu0 0
    %1259 = vmatmul.mubr.bf16.gmra.mrb[0].mxu0 %v1111
    %v1260 = vpop.f32.mrb[0].mxu0
    %v1261 = vadd.f32 %v1040, %v1260
    %v1262 = vpop.f32.mrb[0].mxu0
    %v1263 = vpop.f32.mrb[0].mxu0
    %v1264 = vadd.f32 %v1040, %v1263
    %v1265 = vpop.f32.mrb[0].mxu0
    %1266 = vmatprep.mubr.bf16.mxu0 0
    %1267 = vmatmul.mubr.bf16.gmra.mrb[0].mxu0 %v1112
    %v1268 = vpop.f32.mrb[0].mxu0
    %v1269 = vadd.f32 %v1040, %v1268
    %v1270 = vpop.f32.mrb[0].mxu0
    %v1271 = vpop.f32.mrb[0].mxu0
    %v1272 = vadd.f32 %v1040, %v1271
    %v1273 = vpop.f32.mrb[0].mxu0
    %1274 = vmatprep.mubr.bf16.mxu0 0
    %1275 = vmatmul.mubr.bf16.gmra.mrb[0].mxu0 %v1113
    %v1276 = vpop.f32.mrb[0].mxu0
    %v1277 = vadd.f32 %v1040, %v1276
    %v1278 = vpop.f32.mrb[0].mxu0
    %v1279 = vpop.f32.mrb[0].mxu0
    %v1280 = vadd.f32 %v1040, %v1279
    %v1281 = vpop.f32.mrb[0].mxu0
    %1282 = vmatprep.mubr.bf16.mxu0 0
    %1283 = vmatmul.mubr.bf16.gmra.mrb[0].mxu0 %v1114
    %v1284 = vpop.f32.mrb[0].mxu0
    %v1285 = vadd.f32 %v1040, %v1284
    %v1286 = vpop.f32.mrb[0].mxu0
    %v1287 = vpop.f32.mrb[0].mxu0
    %v1288 = vadd.f32 %v1040, %v1287
    %v1289 = vpop.f32.mrb[0].mxu0
    %1290 = vmatprep.mubr.bf16.mxu0 0
    %1291 = vmatmul.mubr.bf16.gmra.mrb[0].mxu0 %v1115
    %v1292 = vpop.f32.mrb[0].mxu0
    %v1293 = vadd.f32 %v1040, %v1292
    %v1294 = vpop.f32.mrb[0].mxu0
    %v1295 = vpop.f32.mrb[0].mxu0
    %v1296 = vadd.f32 %v1040, %v1295
    %v1297 = vpop.f32.mrb[0].mxu0
    %1298 = vmatprep.mubr.bf16.mxu0 0
    %1299 = vmatmul.mubr.bf16.gmra.mrb[0].mxu0 %v1116
    %v1300 = vpop.f32.mrb[0].mxu0
    %v1301 = vadd.f32 %v1040, %v1300
    %v1302 = vpop.f32.mrb[0].mxu0
    %v1303 = vpop.f32.mrb[0].mxu0
    %v1304 = vadd.f32 %v1040, %v1303
    %v1305 = vpop.f32.mrb[0].mxu0
    %1306 = vmatprep.mubr.bf16.mxu0 0
    %1307 = vmatmul.mubr.bf16.gmra.mrb[0].mxu0 %v1117
    %v1308 = vpop.f32.mrb[0].mxu0
    %v1309 = vadd.f32 %v1040, %v1308
    %v1310 = vpop.f32.mrb[0].mxu0
    %v1311 = vpop.f32.mrb[0].mxu0
    %v1312 = vadd.f32 %v1040, %v1311
    %v1313 = vpop.f32.mrb[0].mxu0
    %1314 = vmatprep.mubr.bf16.mxu0 0
    %1315 = vmatmul.mubr.bf16.gmra.mrb[0].mxu0 %v1118
    %v1316 = vpop.f32.mrb[0].mxu0
    %v1317 = vadd.f32 %v1040, %v1316
    %v1318 = vpop.f32.mrb[0].mxu0
    %v1319 = vpop.f32.mrb[0].mxu0
    %v1320 = vadd.f32 %v1040, %v1319
    %v1321 = vpop.f32.mrb[0].mxu0
    %1322 = vmatprep.mubr.bf16.mxu0 0
    %1323 = vmatmul.mubr.bf16.gmra.mrb[0].mxu0 %v1119
    %v1324 = vpop.f32.mrb[0].mxu0
    %v1325 = vadd.f32 %v1040, %v1324
    %v1326 = vpop.f32.mrb[0].mxu0
    %v1327 = vpop.f32.mrb[0].mxu0
    %v1328 = vadd.f32 %v1040, %v1327
    %v1329 = vpop.f32.mrb[0].mxu0
    %1330 = vmatprep.mubr.bf16.mxu0 0
    %1331 = vmatmul.mubr.bf16.gmra.mrb[0].mxu0 %v1120
    %v1332 = vpop.f32.mrb[0].mxu0
    %v1333 = vadd.f32 %v1040, %v1332
    %v1334 = vpop.f32.mrb[0].mxu0
    %v1335 = vpop.f32.mrb[0].mxu0
    %v1336 = vadd.f32 %v1040, %v1335
    %v1337 = vpop.f32.mrb[0].mxu0
    %1338 = vmatprep.mubr.bf16.mxu0 0
    %1339 = vmatmul.mubr.bf16.gmra.mrb[0].mxu0 %v1121
    %v1340 = vpop.f32.mrb[0].mxu0
    %v1341 = vadd.f32 %v1040, %v1340
    %v1342 = vpop.f32.mrb[0].mxu0
    %v1343 = vpop.f32.mrb[0].mxu0
    %v1344 = vadd.f32 %v1040, %v1343
    %v1345 = vpop.f32.mrb[0].mxu0
    %1346 = vdwg.mxu0
    %v1347 = vmul.f32 %v643, %v1221
    %v1348 = vmul.f32 %v644, %v1224
    %v1349 = vmul.f32 %v645, %v1229
    %v1350 = vmul.f32 %v646, %v1232
    %v1351 = vmul.f32 %v647, %v1237
    %v1352 = vmul.f32 %v648, %v1240
    %v1353 = vmul.f32 %v649, %v1245
    %v1354 = vmul.f32 %v650, %v1248
    %v1355 = vmul.f32 %v651, %v1253
    %v1356 = vmul.f32 %v652, %v1256
    %v1357 = vmul.f32 %v653, %v1261
    %v1358 = vmul.f32 %v654, %v1264
    %v1359 = vmul.f32 %v655, %v1269
    %v1360 = vmul.f32 %v656, %v1272
    %v1361 = vmul.f32 %v657, %v1277
    %v1362 = vmul.f32 %v658, %v1280
    %v1363 = vmul.f32 %v659, %v1285
    %v1364 = vmul.f32 %v660, %v1288
    %v1365 = vmul.f32 %v661, %v1293
    %v1366 = vmul.f32 %v662, %v1296
    %v1367 = vmul.f32 %v663, %v1301
    %v1368 = vmul.f32 %v664, %v1304
    %v1369 = vmul.f32 %v665, %v1309
    %v1370 = vmul.f32 %v666, %v1312
    %v1371 = vmul.f32 %v667, %v1317
    %v1372 = vmul.f32 %v668, %v1320
    %v1373 = vmul.f32 %v669, %v1325
    %v1374 = vmul.f32 %v670, %v1328
    %v1375 = vmul.f32 %v671, %v1333
    %v1376 = vmul.f32 %v672, %v1336
    %v1377 = vmul.f32 %v673, %v1341
    %v1378 = vmul.f32 %v674, %v1344
    %v1379 = vadd.f32 %v893, %v1347
    %v1380 = vadd.f32 %v896, %v1348
    %v1381 = vadd.f32 %v901, %v1349
    %v1382 = vadd.f32 %v904, %v1350
    %v1383 = vadd.f32 %v909, %v1351
    %v1384 = vadd.f32 %v912, %v1352
    %v1385 = vadd.f32 %v917, %v1353
    %v1386 = vadd.f32 %v920, %v1354
    %v1387 = vadd.f32 %v925, %v1355
    %v1388 = vadd.f32 %v928, %v1356
    %v1389 = vadd.f32 %v933, %v1357
    %v1390 = vadd.f32 %v936, %v1358
    %v1391 = vadd.f32 %v941, %v1359
    %v1392 = vadd.f32 %v944, %v1360
    %v1393 = vadd.f32 %v949, %v1361
    %v1394 = vadd.f32 %v952, %v1362
    %v1395 = vadd.f32 %v957, %v1363
    %v1396 = vadd.f32 %v960, %v1364
    %v1397 = vadd.f32 %v965, %v1365
    %v1398 = vadd.f32 %v968, %v1366
    %v1399 = vadd.f32 %v973, %v1367
    %v1400 = vadd.f32 %v976, %v1368
    %v1401 = vadd.f32 %v981, %v1369
    %v1402 = vadd.f32 %v984, %v1370
    %v1403 = vadd.f32 %v989, %v1371
    %v1404 = vadd.f32 %v992, %v1372
    %v1405 = vadd.f32 %v997, %v1373
    %v1406 = vadd.f32 %v1000, %v1374
    %v1407 = vadd.f32 %v1005, %v1375
    %v1408 = vadd.f32 %v1008, %v1376
    %v1409 = vadd.f32 %v1013, %v1377
    %v1410 = vadd.f32 %v1016, %v1378
    %vm1411 = vcmp.ge.f32.partialorder %v1379, 0.0
    %vm1412 = vcmp.ge.f32.partialorder %v1380, 0.0
    %vm1413 = vcmp.ge.f32.partialorder %v1381, 0.0
    %vm1414 = vcmp.ge.f32.partialorder %v1382, 0.0
    %vm1415 = vcmp.ge.f32.partialorder %v1383, 0.0
    %vm1416 = vcmp.ge.f32.partialorder %v1384, 0.0
    %vm1417 = vcmp.ge.f32.partialorder %v1385, 0.0
    %vm1418 = vcmp.ge.f32.partialorder %v1386, 0.0
    %vm1419 = vcmp.ge.f32.partialorder %v1387, 0.0
    %vm1420 = vcmp.ge.f32.partialorder %v1388, 0.0
    %vm1421 = vcmp.ge.f32.partialorder %v1389, 0.0
    %vm1422 = vcmp.ge.f32.partialorder %v1390, 0.0
    %vm1423 = vcmp.ge.f32.partialorder %v1391, 0.0
    %vm1424 = vcmp.ge.f32.partialorder %v1392, 0.0
    %vm1425 = vcmp.ge.f32.partialorder %v1393, 0.0
    %vm1426 = vcmp.ge.f32.partialorder %v1394, 0.0
    %vm1427 = vcmp.ge.f32.partialorder %v1395, 0.0
    %vm1428 = vcmp.ge.f32.partialorder %v1396, 0.0
    %vm1429 = vcmp.ge.f32.partialorder %v1397, 0.0
    %vm1430 = vcmp.ge.f32.partialorder %v1398, 0.0
    %vm1431 = vcmp.ge.f32.partialorder %v1399, 0.0
    %vm1432 = vcmp.ge.f32.partialorder %v1400, 0.0
    %vm1433 = vcmp.ge.f32.partialorder %v1401, 0.0
    %vm1434 = vcmp.ge.f32.partialorder %v1402, 0.0
    %vm1435 = vcmp.ge.f32.partialorder %v1403, 0.0
    %vm1436 = vcmp.ge.f32.partialorder %v1404, 0.0
    %vm1437 = vcmp.ge.f32.partialorder %v1405, 0.0
    %vm1438 = vcmp.ge.f32.partialorder %v1406, 0.0
    %vm1439 = vcmp.ge.f32.partialorder %v1407, 0.0
    %vm1440 = vcmp.ge.f32.partialorder %v1408, 0.0
    %vm1441 = vcmp.ge.f32.partialorder %v1409, 0.0
    %vm1442 = vcmp.ge.f32.partialorder %v1410, 0.0
    %v1443 = vmul.f32 %v1379, 0.01
    %v1444 = vmul.f32 %v1380, 0.01
    %v1445 = vmul.f32 %v1381, 0.01
    %v1446 = vmul.f32 %v1382, 0.01
    %v1447 = vmul.f32 %v1383, 0.01
    %v1448 = vmul.f32 %v1384, 0.01
    %v1449 = vmul.f32 %v1385, 0.01
    %v1450 = vmul.f32 %v1386, 0.01
    %v1451 = vmul.f32 %v1387, 0.01
    %v1452 = vmul.f32 %v1388, 0.01
    %v1453 = vmul.f32 %v1389, 0.01
    %v1454 = vmul.f32 %v1390, 0.01
    %v1455 = vmul.f32 %v1391, 0.01
    %v1456 = vmul.f32 %v1392, 0.01
    %v1457 = vmul.f32 %v1393, 0.01
    %v1458 = vmul.f32 %v1394, 0.01
    %v1459 = vmul.f32 %v1395, 0.01
    %v1460 = vmul.f32 %v1396, 0.01
    %v1461 = vmul.f32 %v1397, 0.01
    %v1462 = vmul.f32 %v1398, 0.01
    %v1463 = vmul.f32 %v1399, 0.01
    %v1464 = vmul.f32 %v1400, 0.01
    %v1465 = vmul.f32 %v1401, 0.01
    %v1466 = vmul.f32 %v1402, 0.01
    %v1467 = vmul.f32 %v1403, 0.01
    %v1468 = vmul.f32 %v1404, 0.01
    %v1469 = vmul.f32 %v1405, 0.01
    %v1470 = vmul.f32 %v1406, 0.01
    %v1471 = vmul.f32 %v1407, 0.01
    %v1472 = vmul.f32 %v1408, 0.01
    %v1473 = vmul.f32 %v1409, 0.01
    %v1474 = vmul.f32 %v1410, 0.01
    %v1475 = vsel %vm1411, %v1379, %v1443
    %v1476 = vsel %vm1412, %v1380, %v1444
    %v1477 = vsel %vm1413, %v1381, %v1445
    %v1478 = vsel %vm1414, %v1382, %v1446
    %v1479 = vsel %vm1415, %v1383, %v1447
    %v1480 = vsel %vm1416, %v1384, %v1448
    %v1481 = vsel %vm1417, %v1385, %v1449
    %v1482 = vsel %vm1418, %v1386, %v1450
    %v1483 = vsel %vm1419, %v1387, %v1451
    %v1484 = vsel %vm1420, %v1388, %v1452
    %v1485 = vsel %vm1421, %v1389, %v1453
    %v1486 = vsel %vm1422, %v1390, %v1454
    %v1487 = vsel %vm1423, %v1391, %v1455
    %v1488 = vsel %vm1424, %v1392, %v1456
    %v1489 = vsel %vm1425, %v1393, %v1457
    %v1490 = vsel %vm1426, %v1394, %v1458
    %v1491 = vsel %vm1427, %v1395, %v1459
    %v1492 = vsel %vm1428, %v1396, %v1460
    %v1493 = vsel %vm1429, %v1397, %v1461
    %v1494 = vsel %vm1430, %v1398, %v1462
    %v1495 = vsel %vm1431, %v1399, %v1463
    %v1496 = vsel %vm1432, %v1400, %v1464
    %v1497 = vsel %vm1433, %v1401, %v1465
    %v1498 = vsel %vm1434, %v1402, %v1466
    %v1499 = vsel %vm1435, %v1403, %v1467
    %v1500 = vsel %vm1436, %v1404, %v1468
    %v1501 = vsel %vm1437, %v1405, %v1469
    %v1502 = vsel %vm1438, %v1406, %v1470
    %v1503 = vsel %vm1439, %v1407, %v1471
    %v1504 = vsel %vm1440, %v1408, %v1472
    %v1505 = vsel %vm1441, %v1409, %v1473
    %v1506 = vsel %vm1442, %v1410, %v1474
    %v1507 = vpack.c.bf16 %v1476, %v1475
    %v1508 = vpack.c.bf16 %v1478, %v1477
    %v1509 = vpack.c.bf16 %v1480, %v1479
    %v1510 = vpack.c.bf16 %v1482, %v1481
    %v1511 = vpack.c.bf16 %v1484, %v1483
    %v1512 = vpack.c.bf16 %v1486, %v1485
    %v1513 = vpack.c.bf16 %v1488, %v1487
    %v1514 = vpack.c.bf16 %v1490, %v1489
    %v1515 = vpack.c.bf16 %v1492, %v1491
    %v1516 = vpack.c.bf16 %v1494, %v1493
    %v1517 = vpack.c.bf16 %v1496, %v1495
    %v1518 = vpack.c.bf16 %v1498, %v1497
    %v1519 = vpack.c.bf16 %v1500, %v1499
    %v1520 = vpack.c.bf16 %v1502, %v1501
    %v1521 = vpack.c.bf16 %v1504, %v1503
    %v1522 = vpack.c.bf16 %v1506, %v1505
    %v1539 = vunpack.c.l.b16 %v1507
    %v1540 = vunpack.c.h.b16 %v1507
    %v1541 = vunpack.c.l.b16 %v1508
    %v1542 = vunpack.c.h.b16 %v1508
    %v1543 = vunpack.c.l.b16 %v1509
    %v1544 = vunpack.c.h.b16 %v1509
    %v1545 = vunpack.c.l.b16 %v1510
    %v1546 = vunpack.c.h.b16 %v1510
    %v1547 = vunpack.c.l.b16 %v1511
    %v1548 = vunpack.c.h.b16 %v1511
    %v1549 = vunpack.c.l.b16 %v1512
    %v1550 = vunpack.c.h.b16 %v1512
    %v1551 = vunpack.c.l.b16 %v1513
    %v1552 = vunpack.c.h.b16 %v1513
    %v1553 = vunpack.c.l.b16 %v1514
    %v1554 = vunpack.c.h.b16 %v1514
    %v1555 = vunpack.c.l.b16 %v1515
    %v1556 = vunpack.c.h.b16 %v1515
    %v1557 = vunpack.c.l.b16 %v1516
    %v1558 = vunpack.c.h.b16 %v1516
    %v1559 = vunpack.c.l.b16 %v1517
    %v1560 = vunpack.c.h.b16 %v1517
    %v1561 = vunpack.c.l.b16 %v1518
    %v1562 = vunpack.c.h.b16 %v1518
    %v1563 = vunpack.c.l.b16 %v1519
    %v1564 = vunpack.c.h.b16 %v1519
    %v1565 = vunpack.c.l.b16 %v1520
    %v1566 = vunpack.c.h.b16 %v1520
    %v1567 = vunpack.c.l.b16 %v1521
    %v1568 = vunpack.c.h.b16 %v1521
    %v1569 = vunpack.c.l.b16 %v1522
    %v1570 = vunpack.c.h.b16 %v1522
    %v1571 = vpack.c.b16 %v1539, %v1539
    %v1572 = vpack.c.b16 %v1540, %v1540
    %v1573 = vpack.c.b16 %v1541, %v1541
    %v1574 = vpack.c.b16 %v1542, %v1542
    %v1575 = vpack.c.b16 %v1543, %v1543
    %v1576 = vpack.c.b16 %v1544, %v1544
    %v1577 = vpack.c.b16 %v1545, %v1545
    %v1578 = vpack.c.b16 %v1546, %v1546
    %v1579 = vpack.c.b16 %v1547, %v1547
    %v1580 = vpack.c.b16 %v1548, %v1548
    %v1581 = vpack.c.b16 %v1549, %v1549
    %v1582 = vpack.c.b16 %v1550, %v1550
    %v1583 = vpack.c.b16 %v1551, %v1551
    %v1584 = vpack.c.b16 %v1552, %v1552
    %v1585 = vpack.c.b16 %v1553, %v1553
    %v1586 = vpack.c.b16 %v1554, %v1554
    %v1587 = vpack.c.b16 %v1555, %v1555
    %v1588 = vpack.c.b16 %v1556, %v1556
    %v1589 = vpack.c.b16 %v1557, %v1557
    %v1590 = vpack.c.b16 %v1558, %v1558
    %v1591 = vpack.c.b16 %v1559, %v1559
    %v1592 = vpack.c.b16 %v1560, %v1560
    %v1593 = vpack.c.b16 %v1561, %v1561
    %v1594 = vpack.c.b16 %v1562, %v1562
    %v1595 = vpack.c.b16 %v1563, %v1563
    %v1596 = vpack.c.b16 %v1564, %v1564
    %v1597 = vpack.c.b16 %v1565, %v1565
    %v1598 = vpack.c.b16 %v1566, %v1566
    %v1599 = vpack.c.b16 %v1567, %v1567
    %v1600 = vpack.c.b16 %v1568, %v1568
    %v1601 = vpack.c.b16 %v1569, %v1569
    %v1602 = vpack.c.b16 %v1570, %v1570
    %1635 = vst [vmem:[%s7] sm:$0xf] %v1571
    %1636 = vst [vmem:[%s7 + $0x4] sm:$0xf] %v1572
    %1637 = vst [vmem:[%s7 + $0x8] sm:$0xf] %v1573
    %1638 = vst [vmem:[%s7 + $0xc] sm:$0xf] %v1574
    %1639 = vst [vmem:[%s7 + $0x10] sm:$0xf] %v1575
    %1640 = vst [vmem:[%s7 + $0x14] sm:$0xf] %v1576
    %1641 = vst [vmem:[%s7 + $0x18] sm:$0xf] %v1577
    %1642 = vst [vmem:[%s7 + $0x1c] sm:$0xf] %v1578
    %1643 = vst [vmem:[%s7 + $0x20] sm:$0xf] %v1579
    %1644 = vst [vmem:[%s7 + $0x24] sm:$0xf] %v1580
    %1645 = vst [vmem:[%s7 + $0x28] sm:$0xf] %v1581
    %1646 = vst [vmem:[%s7 + $0x2c] sm:$0xf] %v1582
    %1647 = vst [vmem:[%s7 + $0x30] sm:$0xf] %v1583
    %1648 = vst [vmem:[%s7 + $0x34] sm:$0xf] %v1584
    %1649 = vst [vmem:[%s7 + $0x38] sm:$0xf] %v1585
    %1650 = vst [vmem:[%s7 + $0x3c] sm:$0xf] %v1586
    %1651 = vst [vmem:[%s7 + $0x40] sm:$0xf] %v1587
    %1652 = vst [vmem:[%s7 + $0x44] sm:$0xf] %v1588
    %1653 = vst [vmem:[%s7 + $0x48] sm:$0xf] %v1589
    %1654 = vst [vmem:[%s7 + $0x4c] sm:$0xf] %v1590
    %1655 = vst [vmem:[%s7 + $0x50] sm:$0xf] %v1591
    %1656 = vst [vmem:[%s7 + $0x54] sm:$0xf] %v1592
    %1657 = vst [vmem:[%s7 + $0x58] sm:$0xf] %v1593
    %1658 = vst [vmem:[%s7 + $0x5c] sm:$0xf] %v1594
    %1659 = vst [vmem:[%s7 + $0x60] sm:$0xf] %v1595
    %1660 = vst [vmem:[%s7 + $0x64] sm:$0xf] %v1596
    %1661 = vst [vmem:[%s7 + $0x68] sm:$0xf] %v1597
    %1662 = vst [vmem:[%s7 + $0x6c] sm:$0xf] %v1598
    %1663 = vst [vmem:[%s7 + $0x70] sm:$0xf] %v1599
    %1664 = vst [vmem:[%s7 + $0x74] sm:$0xf] %v1600
    %1665 = vst [vmem:[%s7 + $0x78] sm:$0xf] %v1601
    %1666 = vst [vmem:[%s7 + $0x7c] sm:$0xf] %v1602
  $region37: #{ngcf_forward.3} parent=0 // pred_fallthru
    _
  // Predicated region
  $region38: #{ngcf_forward.3} parent=0 // pred_check
    _
  $region39: #{ngcf_forward.3} parent=0 // pred_check_branch
    %1668 = sbr.rel (0) target = $region41
  $region40: #{ngcf_forward.3} parent=0 // pred_region
    _
  $region41: #{ngcf_forward.3} parent=0 // pred_fallthru
    _
  // Predicated region
  $region42: #{ngcf_forward.3} parent=0 // pred_check
    _
  $region43: #{ngcf_forward.3} parent=0 // pred_check_branch
    %1670 = sbr.rel (0) target = $region45
  $region44: #{ngcf_forward.3} parent=0 // pred_region
    _
  $region45: #{ngcf_forward.3} parent=0 // pred_fallthru
    _

</llo_original>
